<compile_context>
chip_gen: v7x
topology: tpu7x:2x2x1
jax: 0.10.0
libtpu: 0.0.40
codegen_flags: <defaults>
</compile_context>

<pallas_src>
import functools
import math

import jax
import jax.numpy as jnp
from jax.experimental import pallas as pl
from jax.experimental.pallas import tpu as pltpu


def _round_up(x, m):
    return ((x + m - 1) // m) * m


def _sigmoid(x):
    # tanh-form sigmoid: one EUP op + trivial VPU ops (exact same math).
    return 0.5 * (jnp.tanh(0.5 * x) + 1.0)


def _lstm_kernel(g_ref, whh_ref, hseq_ref, h_ref, c_ref, *,
                 hidden_pad, t_blk, seq_len, mask_tail):
    """One grid step == one block of `t_blk` LSTM time steps.

    g_ref    : (t_blk, bs, 4*Hp)  precomputed x @ W_ih + b (time-major slab)
    whh_ref  : (Hp, 4*Hp)         hidden->gates weights (bf16 or f32)
    hseq_ref : (t_blk, bs, Hp)    hidden-state outputs for this time block
    h_ref    : (bs, Hp)           running hidden state (resident output block)
    c_ref    : (bs, Hp)           running cell state   (resident output block)
    """
    blk = pl.program_id(0)

    @pl.when(blk == 0)
    def _init():
        h_ref[...] = jnp.zeros_like(h_ref)
        c_ref[...] = jnp.zeros_like(c_ref)

    hp = hidden_pad
    h = h_ref[...]   # f32 state
    c = c_ref[...]

    # Static unroll over the time block; every access below is a plain
    # integer-indexed, lane-aligned load/store (no size-1 slice+reshape).
    for i in range(t_blk):
        g_t = g_ref[i].astype(jnp.float32)                          # (bs, 4Hp)
        # MXU operands in the (bf16) weight dtype, f32 accumulation; W_hh is
        # read through the ref so it stays a VMEM-resident matmul operand.
        gates = g_t + jnp.dot(h.astype(whh_ref.dtype), whh_ref[...],
                              preferred_element_type=jnp.float32)

        i_t = _sigmoid(gates[:, 0 * hp:1 * hp])
        f_t = _sigmoid(gates[:, 1 * hp:2 * hp])
        g_g = jnp.tanh(gates[:, 2 * hp:3 * hp])
        o_t = _sigmoid(gates[:, 3 * hp:4 * hp])

        c_new = f_t * c + i_t * g_g
        h_new = o_t * jnp.tanh(c_new)

        if mask_tail:  # only traced when seq was padded to a multiple of t_blk
            valid = (blk * t_blk + i) < seq_len
            c_new = jnp.where(valid, c_new, c)
            h_new = jnp.where(valid, h_new, h)

        c = c_new
        h = h_new
        hseq_ref[i] = h.astype(hseq_ref.dtype)

    h_ref[...] = h
    c_ref[...] = c


def lstm_forward(x, weight_ih, weight_hh, bias, *, time_block=None,
                 mxu_dtype=jnp.bfloat16):
    """x: (bs, seq, D) -> (hidden_seq (bs, seq, H), (h_T (bs, H), c_T (bs, H))).

    mxu_dtype controls the storage dtype of W_hh and the streamed G tensor
    (MXU operands / DMA payloads). Gate math + state are always f32.
    """
    bs, seq_sz, D = x.shape
    H4 = weight_ih.shape[1]
    HS = H4 // 4

    # ---- lane alignment: pad each gate's H columns up to a multiple of 128 ----
    # Padded weight/bias columns (and padded W_hh rows) are zero, so padded
    # state lanes stay exactly zero: the math on real lanes is unchanged.
    HP = _round_up(HS, 128)
    if HP != HS:
        pad = HP - HS
        wih_p = jnp.pad(weight_ih.reshape(D, 4, HS),
                        ((0, 0), (0, 0), (0, pad))).reshape(D, 4 * HP)
        whh_p = jnp.pad(weight_hh.reshape(HS, 4, HS),
                        ((0, pad), (0, 0), (0, pad))).reshape(HP, 4 * HP)
        bias_p = jnp.pad(bias.reshape(4, HS), ((0, 0), (0, pad))).reshape(4 * HP)
    else:
        wih_p, whh_p, bias_p = weight_ih, weight_hh, bias

    mxu_itemsize = jnp.dtype(mxu_dtype).itemsize
    out_itemsize = jnp.dtype(x.dtype).itemsize

    # ---- time blocking: multiple of 8, sized against a conservative VMEM budget
    if time_block is None:
        budget = 16 * 2**20  # safe under v5e/v6e/v7x scoped-VMEM defaults
        per_step = 2 * bs * (4 * HP * mxu_itemsize + HP * out_itemsize)  # 2x: pipelining
        fixed = HP * 4 * HP * mxu_itemsize + 4 * bs * HP * 4             # W_hh + h/c
        max_blk = max(8, (budget - fixed) // max(per_step, 1))
        t_blk = int(min(64, _round_up(seq_sz, 8), (max_blk // 8) * 8))
        t_blk = max(t_blk, 8)
    else:
        t_blk = int(time_block)
    seq_pad = _round_up(seq_sz, t_blk)

    # ---- hoist the input projection out of the recurrence: one big matmul ----
    # Computed directly in time-major layout (seq, bs, 4*HP) so each kernel
    # step reads one contiguous sublane block; streamed in mxu_dtype.
    x_tm = jnp.transpose(x, (1, 0, 2)).astype(jnp.float32)          # (seq, bs, D)
    gproj = (x_tm.reshape(seq_sz * bs, D) @ wih_p.astype(jnp.float32)
             + bias_p.astype(jnp.float32))
    gproj = gproj.reshape(seq_sz, bs, 4 * HP).astype(mxu_dtype)
    if seq_pad != seq_sz:
        gproj = jnp.pad(gproj, ((0, seq_pad - seq_sz), (0, 0), (0, 0)))

    whh_mxu = whh_p.astype(mxu_dtype)

    kernel = functools.partial(
        _lstm_kernel,
        hidden_pad=HP, t_blk=t_blk, seq_len=seq_sz,
        mask_tail=(seq_pad != seq_sz))

    out_shapes = (
        jax.ShapeDtypeStruct((seq_pad, bs, HP), x.dtype),   # hidden_seq (time-major)
        jax.ShapeDtypeStruct((bs, HP), jnp.float32),        # h_T
        jax.ShapeDtypeStruct((bs, HP), jnp.float32),        # c_T
    )

    grid_spec = pltpu.PrefetchScalarGridSpec(
        num_scalar_prefetch=0,
        grid=(seq_pad // t_blk,),
        in_specs=[
            pl.BlockSpec((t_blk, bs, 4 * HP), lambda b: (b, 0, 0)),   # G time slab
            pl.BlockSpec((HP, 4 * HP), lambda b: (0, 0),
                         pipeline_mode=pl.Buffered(1)),               # W_hh, single-buffered
        ],
        out_specs=[
            pl.BlockSpec((t_blk, bs, HP), lambda b: (b, 0, 0)),       # hidden_seq slab
            pl.BlockSpec((bs, HP), lambda b: (0, 0)),                 # h (resident)
            pl.BlockSpec((bs, HP), lambda b: (0, 0)),                 # c (resident)
        ],
    )

    # Explicit scoped-VMEM limit: 2x streamed slabs + W_hh + state, with slack.
    est = (2 * t_blk * bs * 4 * HP * mxu_itemsize          # G slab, double-buffered
           + 2 * t_blk * bs * HP * out_itemsize            # hseq slab, double-buffered
           + HP * 4 * HP * mxu_itemsize                    # W_hh, single buffer
           + 4 * bs * HP * 4)                              # h/c resident blocks
    vmem_limit = int(min(max(2 * est, 16 * 2**20), 64 * 2**20))

    hseq_tm, h_t, c_t = pl.pallas_call(
        kernel,
        out_shape=out_shapes,
        grid_spec=grid_spec,
        compiler_params=pltpu.CompilerParams(
            dimension_semantics=("arbitrary",),   # strict sequential time recurrence
            vmem_limit_bytes=vmem_limit,
        ),
    )(gproj, whh_mxu)

    # back to the module's (batch, seq, feature) layout; drop padding
    hseq = jnp.transpose(hseq_tm[:seq_sz, :, :HS], (1, 0, 2))
    h_t = h_t[:, :HS]
    c_t = c_t[:, :HS]
    return hseq.astype(x.dtype), (h_t.astype(x.dtype), c_t.astype(x.dtype))


def _xavier_uniform(key, shape, dtype=jnp.float32):
    fan_in, fan_out = shape[0], shape[1]
    a = math.sqrt(6.0 / (fan_in + fan_out))
    return jax.random.uniform(key, shape, dtype=dtype, minval=-a, maxval=a)


def _reference_lstm(x, weight_ih, weight_hh, bias):
    """Pure-JAX reference mirroring the PyTorch loop exactly."""
    bs, seq_sz, _ = x.shape
    HS = weight_hh.shape[0]
    h_t = jnp.zeros((HS,), x.dtype)
    c_t = jnp.zeros((HS,), x.dtype)
    outs = []
    for t in range(seq_sz):
        x_t = x[:, t, :]
        gates = x_t @ weight_ih + h_t @ weight_hh + bias
        i_t = jax.nn.sigmoid(gates[:, :HS])
        f_t = jax.nn.sigmoid(gates[:, HS:2 * HS])
        g_t = jnp.tanh(gates[:, 2 * HS:3 * HS])
        o_t = jax.nn.sigmoid(gates[:, 3 * HS:])
        c_t = f_t * c_t + i_t * g_t
        h_t = o_t * jnp.tanh(c_t)
        outs.append(h_t[None])
    hidden_seq = jnp.concatenate(outs, axis=0)          # (seq, bs, H)
    hidden_seq = jnp.transpose(hidden_seq, (1, 0, 2))   # (bs, seq, H)
    return hidden_seq, (h_t, c_t)


if __name__ == "__main__":
    batch, seq, input_size, hidden_size = 2, 8, 16, 32

    key = jax.random.PRNGKey(0)
    k_x, k_wih, k_whh = jax.random.split(key, 3)

    x = jax.random.normal(k_x, (batch, seq, input_size), dtype=jnp.float32)
    weight_ih = _xavier_uniform(k_wih, (input_size, hidden_size * 4))
    weight_hh = _xavier_uniform(k_whh, (hidden_size, hidden_size * 4))
    bias = jnp.zeros((hidden_size * 4,), jnp.float32)

    ref_seq, (ref_h, ref_c) = _reference_lstm(x, weight_ih, weight_hh, bias)

    # Production config: bf16 MXU operands / streamed G, f32 accumulation.
    fwd = jax.jit(lstm_forward)
    hidden_seq, (h_t, c_t) = fwd(x, weight_ih, weight_hh, bias)
    jax.block_until_ready((hidden_seq, h_t, c_t))

    assert hidden_seq.shape == (batch, seq, hidden_size)
    assert h_t.shape == (batch, hidden_size) and c_t.shape == (batch, hidden_size)
    # bf16 recurrence: loose tolerance against the f32 reference
    assert jnp.allclose(hidden_seq, ref_seq, atol=5e-2, rtol=5e-2)
    assert jnp.allclose(h_t, ref_h, atol=5e-2, rtol=5e-2)
    assert jnp.allclose(c_t, ref_c, atol=5e-2, rtol=5e-2)

    # Exact-path check: f32 MXU operands must match the reference tightly.
    fwd_f32 = jax.jit(functools.partial(lstm_forward, mxu_dtype=jnp.float32))
    hs32, (h32, c32) = fwd_f32(x, weight_ih, weight_hh, bias)
    jax.block_until_ready((hs32, h32, c32))
    assert jnp.allclose(hs32, ref_seq, atol=1e-5, rtol=1e-5)
    assert jnp.allclose(h32, ref_h, atol=1e-5, rtol=1e-5)
    assert jnp.allclose(c32, ref_c, atol=1e-5, rtol=1e-5)

    print("KERNEL_OK")
</pallas_src>

<mosaic_0001>
module attributes {stable_mosaic.version = 11 : i64} {
  func.func @_lstm_kernel(%arg0: i32, %arg1: memref<8x2x512xbf16, #tpu.memory_space<vmem>>, %arg2: memref<128x512xbf16, #tpu.memory_space<vmem>>, %arg3: memref<8x2x128xf32, #tpu.memory_space<vmem>>, %arg4: memref<2x128xf32, #tpu.memory_space<vmem>>, %arg5: memref<2x128xf32, #tpu.memory_space<vmem>>) attributes {dimension_semantics = [#tpu.dimension_semantics<arbitrary>], iteration_bounds = array<i64: 1>, scalar_prefetch = 0 : i64, scratch_operands = 0 : i64, tpu.core_type = #tpu.core_type<tc>, window_params = [{transform_indices = @transform_0, window_bounds = array<i64: 8, 2, 512>}, {pipeline_mode = #tpu.pipeline_mode<synchronous>, transform_indices = @transform_1, window_bounds = array<i64: 128, 512>}, {transform_indices = @transform_2, window_bounds = array<i64: 8, 2, 128>}, {pipeline_mode = #tpu.pipeline_mode<synchronous>, transform_indices = @transform_3, window_bounds = array<i64: 2, 128>}, {pipeline_mode = #tpu.pipeline_mode<synchronous>, transform_indices = @transform_4, window_bounds = array<i64: 2, 128>}]} {
    %c0_i32 = arith.constant 0 : i32
    %0 = arith.cmpi eq, %arg0, %c0_i32 : i32
    %1 = arith.extui %0 : i1 to i32
    %c0_i32_0 = arith.constant 0 : i32
    %2 = arith.cmpi ne, %1, %c0_i32_0 : i32
    scf.if %2 {
      %cst_144 = arith.constant 0.000000e+00 : f32
      %335 = vector.broadcast %cst_144 : f32 to vector<2x128xf32>
      %c0_145 = arith.constant 0 : index
      %c0_146 = arith.constant 0 : index
      %336 = vector.load %arg4[%c0_145, %c0_146] : memref<2x128xf32, #tpu.memory_space<vmem>>, vector<2x128xf32>
      tpu.vector_store %arg4[%c0_145, %c0_146], %335 {strides = array<i32>} : memref<2x128xf32, #tpu.memory_space<vmem>>, vector<2x128xf32>,
      %cst_147 = arith.constant 0.000000e+00 : f32
      %337 = vector.broadcast %cst_147 : f32 to vector<2x128xf32>
      %c0_148 = arith.constant 0 : index
      %c0_149 = arith.constant 0 : index
      %338 = vector.load %arg5[%c0_148, %c0_149] : memref<2x128xf32, #tpu.memory_space<vmem>>, vector<2x128xf32>
      tpu.vector_store %arg5[%c0_148, %c0_149], %337 {strides = array<i32>} : memref<2x128xf32, #tpu.memory_space<vmem>>, vector<2x128xf32>,
    } else {
    }
    %c0 = arith.constant 0 : index
    %c0_1 = arith.constant 0 : index
    %3 = vector.load %arg4[%c0, %c0_1] : memref<2x128xf32, #tpu.memory_space<vmem>>, vector<2x128xf32>
    %c0_2 = arith.constant 0 : index
    %c0_3 = arith.constant 0 : index
    %4 = vector.load %arg5[%c0_2, %c0_3] : memref<2x128xf32, #tpu.memory_space<vmem>>, vector<2x128xf32>
    %c0_4 = arith.constant 0 : index
    %c0_5 = arith.constant 0 : index
    %c0_6 = arith.constant 0 : index
    %5 = vector.load %arg1[%c0_4, %c0_5, %c0_6] : memref<8x2x512xbf16, #tpu.memory_space<vmem>>, vector<1x2x512xbf16>
    %6 = vector.shape_cast %5 : vector<1x2x512xbf16> to vector<2x512xbf16>
    %7 = arith.extf %6 : vector<2x512xbf16> to vector<2x512xf32>
    %8 = arith.truncf %3 : vector<2x128xf32> to vector<2x128xbf16>
    %c0_7 = arith.constant 0 : index
    %c0_8 = arith.constant 0 : index
    %9 = vector.load %arg2[%c0_7, %c0_8] : memref<128x512xbf16, #tpu.memory_space<vmem>>, vector<128x512xbf16>
    %cst = arith.constant dense<0.000000e+00> : vector<2x512xf32>
    %10 = tpu.matmul %8, %9, %cst {dimension_numbers = #tpu.dot_dimension_numbers<[1], [0], [0], [1], [0, 0, 1, 1], [], []>} : vector<2x128xbf16>, vector<128x512xbf16>, vector<2x512xf32> -> vector<2x512xf32>
    %11 = arith.addf %7, %10 : vector<2x512xf32>
    %12 = vector.extract_strided_slice %11 {offsets = [0, 0], sizes = [2, 128], strides = [1, 1]} : vector<2x512xf32> to vector<2x128xf32>
    %cst_9 = arith.constant 5.000000e-01 : f32
    %13 = vector.broadcast %cst_9 : f32 to vector<2x128xf32>
    %14 = arith.mulf %13, %12 : vector<2x128xf32>
    %15 = math.tanh %14 : vector<2x128xf32>
    %cst_10 = arith.constant 1.000000e+00 : f32
    %16 = vector.broadcast %cst_10 : f32 to vector<2x128xf32>
    %17 = arith.addf %15, %16 : vector<2x128xf32>
    %cst_11 = arith.constant 5.000000e-01 : f32
    %18 = vector.broadcast %cst_11 : f32 to vector<2x128xf32>
    %19 = arith.mulf %18, %17 : vector<2x128xf32>
    %20 = vector.extract_strided_slice %11 {offsets = [0, 128], sizes = [2, 128], strides = [1, 1]} : vector<2x512xf32> to vector<2x128xf32>
    %cst_12 = arith.constant 5.000000e-01 : f32
    %21 = vector.broadcast %cst_12 : f32 to vector<2x128xf32>
    %22 = arith.mulf %21, %20 : vector<2x128xf32>
    %23 = math.tanh %22 : vector<2x128xf32>
    %cst_13 = arith.constant 1.000000e+00 : f32
    %24 = vector.broadcast %cst_13 : f32 to vector<2x128xf32>
    %25 = arith.addf %23, %24 : vector<2x128xf32>
    %cst_14 = arith.constant 5.000000e-01 : f32
    %26 = vector.broadcast %cst_14 : f32 to vector<2x128xf32>
    %27 = arith.mulf %26, %25 : vector<2x128xf32>
    %28 = vector.extract_strided_slice %11 {offsets = [0, 256], sizes = [2, 128], strides = [1, 1]} : vector<2x512xf32> to vector<2x128xf32>
    %29 = math.tanh %28 : vector<2x128xf32>
    %30 = vector.extract_strided_slice %11 {offsets = [0, 384], sizes = [2, 128], strides = [1, 1]} : vector<2x512xf32> to vector<2x128xf32>
    %cst_15 = arith.constant 5.000000e-01 : f32
    %31 = vector.broadcast %cst_15 : f32 to vector<2x128xf32>
    %32 = arith.mulf %31, %30 : vector<2x128xf32>
    %33 = math.tanh %32 : vector<2x128xf32>
    %cst_16 = arith.constant 1.000000e+00 : f32
    %34 = vector.broadcast %cst_16 : f32 to vector<2x128xf32>
    %35 = arith.addf %33, %34 : vector<2x128xf32>
    %cst_17 = arith.constant 5.000000e-01 : f32
    %36 = vector.broadcast %cst_17 : f32 to vector<2x128xf32>
    %37 = arith.mulf %36, %35 : vector<2x128xf32>
    %38 = arith.mulf %27, %4 : vector<2x128xf32>
    %39 = arith.mulf %19, %29 : vector<2x128xf32>
    %40 = arith.addf %38, %39 : vector<2x128xf32>
    %41 = math.tanh %40 : vector<2x128xf32>
    %42 = arith.mulf %37, %41 : vector<2x128xf32>
    %c0_18 = arith.constant 0 : index
    %c0_19 = arith.constant 0 : index
    %c0_20 = arith.constant 0 : index
    %43 = vector.load %arg3[%c0_18, %c0_19, %c0_20] : memref<8x2x128xf32, #tpu.memory_space<vmem>>, vector<1x2x128xf32>
    %44 = vector.shape_cast %43 : vector<1x2x128xf32> to vector<2x128xf32>
    %45 = vector.shape_cast %42 : vector<2x128xf32> to vector<1x2x128xf32>
    tpu.vector_store %arg3[%c0_18, %c0_19, %c0_20], %45 {strides = array<i32>} : memref<8x2x128xf32, #tpu.memory_space<vmem>>, vector<1x2x128xf32>,
    %c1 = arith.constant 1 : index
    %c0_21 = arith.constant 0 : index
    %c0_22 = arith.constant 0 : index
    %46 = vector.load %arg1[%c1, %c0_21, %c0_22] : memref<8x2x512xbf16, #tpu.memory_space<vmem>>, vector<1x2x512xbf16>
    %47 = vector.shape_cast %46 : vector<1x2x512xbf16> to vector<2x512xbf16>
    %48 = arith.extf %47 : vector<2x512xbf16> to vector<2x512xf32>
    %49 = arith.truncf %42 : vector<2x128xf32> to vector<2x128xbf16>
    %c0_23 = arith.constant 0 : index
    %c0_24 = arith.constant 0 : index
    %50 = vector.load %arg2[%c0_23, %c0_24] : memref<128x512xbf16, #tpu.memory_space<vmem>>, vector<128x512xbf16>
    %cst_25 = arith.constant dense<0.000000e+00> : vector<2x512xf32>
    %51 = tpu.matmul %49, %50, %cst_25 {dimension_numbers = #tpu.dot_dimension_numbers<[1], [0], [0], [1], [0, 0, 1, 1], [], []>} : vector<2x128xbf16>, vector<128x512xbf16>, vector<2x512xf32> -> vector<2x512xf32>
    %52 = arith.addf %48, %51 : vector<2x512xf32>
    %53 = vector.extract_strided_slice %52 {offsets = [0, 0], sizes = [2, 128], strides = [1, 1]} : vector<2x512xf32> to vector<2x128xf32>
    %cst_26 = arith.constant 5.000000e-01 : f32
    %54 = vector.broadcast %cst_26 : f32 to vector<2x128xf32>
    %55 = arith.mulf %54, %53 : vector<2x128xf32>
    %56 = math.tanh %55 : vector<2x128xf32>
    %cst_27 = arith.constant 1.000000e+00 : f32
    %57 = vector.broadcast %cst_27 : f32 to vector<2x128xf32>
    %58 = arith.addf %56, %57 : vector<2x128xf32>
    %cst_28 = arith.constant 5.000000e-01 : f32
    %59 = vector.broadcast %cst_28 : f32 to vector<2x128xf32>
    %60 = arith.mulf %59, %58 : vector<2x128xf32>
    %61 = vector.extract_strided_slice %52 {offsets = [0, 128], sizes = [2, 128], strides = [1, 1]} : vector<2x512xf32> to vector<2x128xf32>
    %cst_29 = arith.constant 5.000000e-01 : f32
    %62 = vector.broadcast %cst_29 : f32 to vector<2x128xf32>
    %63 = arith.mulf %62, %61 : vector<2x128xf32>
    %64 = math.tanh %63 : vector<2x128xf32>
    %cst_30 = arith.constant 1.000000e+00 : f32
    %65 = vector.broadcast %cst_30 : f32 to vector<2x128xf32>
    %66 = arith.addf %64, %65 : vector<2x128xf32>
    %cst_31 = arith.constant 5.000000e-01 : f32
    %67 = vector.broadcast %cst_31 : f32 to vector<2x128xf32>
    %68 = arith.mulf %67, %66 : vector<2x128xf32>
    %69 = vector.extract_strided_slice %52 {offsets = [0, 256], sizes = [2, 128], strides = [1, 1]} : vector<2x512xf32> to vector<2x128xf32>
    %70 = math.tanh %69 : vector<2x128xf32>
    %71 = vector.extract_strided_slice %52 {offsets = [0, 384], sizes = [2, 128], strides = [1, 1]} : vector<2x512xf32> to vector<2x128xf32>
    %cst_32 = arith.constant 5.000000e-01 : f32
    %72 = vector.broadcast %cst_32 : f32 to vector<2x128xf32>
    %73 = arith.mulf %72, %71 : vector<2x128xf32>
    %74 = math.tanh %73 : vector<2x128xf32>
    %cst_33 = arith.constant 1.000000e+00 : f32
    %75 = vector.broadcast %cst_33 : f32 to vector<2x128xf32>
    %76 = arith.addf %74, %75 : vector<2x128xf32>
    %cst_34 = arith.constant 5.000000e-01 : f32
    %77 = vector.broadcast %cst_34 : f32 to vector<2x128xf32>
    %78 = arith.mulf %77, %76 : vector<2x128xf32>
    %79 = arith.mulf %68, %40 : vector<2x128xf32>
    %80 = arith.mulf %60, %70 : vector<2x128xf32>
    %81 = arith.addf %79, %80 : vector<2x128xf32>
    %82 = math.tanh %81 : vector<2x128xf32>
    %83 = arith.mulf %78, %82 : vector<2x128xf32>
    %c1_35 = arith.constant 1 : index
    %c0_36 = arith.constant 0 : index
    %c0_37 = arith.constant 0 : index
    %84 = vector.load %arg3[%c1_35, %c0_36, %c0_37] : memref<8x2x128xf32, #tpu.memory_space<vmem>>, vector<1x2x128xf32>
    %85 = vector.shape_cast %84 : vector<1x2x128xf32> to vector<2x128xf32>
    %86 = vector.shape_cast %83 : vector<2x128xf32> to vector<1x2x128xf32>
    tpu.vector_store %arg3[%c1_35, %c0_36, %c0_37], %86 {strides = array<i32>} : memref<8x2x128xf32, #tpu.memory_space<vmem>>, vector<1x2x128xf32>,
    %c2 = arith.constant 2 : index
    %c0_38 = arith.constant 0 : index
    %c0_39 = arith.constant 0 : index
    %87 = vector.load %arg1[%c2, %c0_38, %c0_39] : memref<8x2x512xbf16, #tpu.memory_space<vmem>>, vector<1x2x512xbf16>
    %88 = vector.shape_cast %87 : vector<1x2x512xbf16> to vector<2x512xbf16>
    %89 = arith.extf %88 : vector<2x512xbf16> to vector<2x512xf32>
    %90 = arith.truncf %83 : vector<2x128xf32> to vector<2x128xbf16>
    %c0_40 = arith.constant 0 : index
    %c0_41 = arith.constant 0 : index
    %91 = vector.load %arg2[%c0_40, %c0_41] : memref<128x512xbf16, #tpu.memory_space<vmem>>, vector<128x512xbf16>
    %cst_42 = arith.constant dense<0.000000e+00> : vector<2x512xf32>
    %92 = tpu.matmul %90, %91, %cst_42 {dimension_numbers = #tpu.dot_dimension_numbers<[1], [0], [0], [1], [0, 0, 1, 1], [], []>} : vector<2x128xbf16>, vector<128x512xbf16>, vector<2x512xf32> -> vector<2x512xf32>
    %93 = arith.addf %89, %92 : vector<2x512xf32>
    %94 = vector.extract_strided_slice %93 {offsets = [0, 0], sizes = [2, 128], strides = [1, 1]} : vector<2x512xf32> to vector<2x128xf32>
    %cst_43 = arith.constant 5.000000e-01 : f32
    %95 = vector.broadcast %cst_43 : f32 to vector<2x128xf32>
    %96 = arith.mulf %95, %94 : vector<2x128xf32>
    %97 = math.tanh %96 : vector<2x128xf32>
    %cst_44 = arith.constant 1.000000e+00 : f32
    %98 = vector.broadcast %cst_44 : f32 to vector<2x128xf32>
    %99 = arith.addf %97, %98 : vector<2x128xf32>
    %cst_45 = arith.constant 5.000000e-01 : f32
    %100 = vector.broadcast %cst_45 : f32 to vector<2x128xf32>
    %101 = arith.mulf %100, %99 : vector<2x128xf32>
    %102 = vector.extract_strided_slice %93 {offsets = [0, 128], sizes = [2, 128], strides = [1, 1]} : vector<2x512xf32> to vector<2x128xf32>
    %cst_46 = arith.constant 5.000000e-01 : f32
    %103 = vector.broadcast %cst_46 : f32 to vector<2x128xf32>
    %104 = arith.mulf %103, %102 : vector<2x128xf32>
    %105 = math.tanh %104 : vector<2x128xf32>
    %cst_47 = arith.constant 1.000000e+00 : f32
    %106 = vector.broadcast %cst_47 : f32 to vector<2x128xf32>
    %107 = arith.addf %105, %106 : vector<2x128xf32>
    %cst_48 = arith.constant 5.000000e-01 : f32
    %108 = vector.broadcast %cst_48 : f32 to vector<2x128xf32>
    %109 = arith.mulf %108, %107 : vector<2x128xf32>
    %110 = vector.extract_strided_slice %93 {offsets = [0, 256], sizes = [2, 128], strides = [1, 1]} : vector<2x512xf32> to vector<2x128xf32>
    %111 = math.tanh %110 : vector<2x128xf32>
    %112 = vector.extract_strided_slice %93 {offsets = [0, 384], sizes = [2, 128], strides = [1, 1]} : vector<2x512xf32> to vector<2x128xf32>
    %cst_49 = arith.constant 5.000000e-01 : f32
    %113 = vector.broadcast %cst_49 : f32 to vector<2x128xf32>
    %114 = arith.mulf %113, %112 : vector<2x128xf32>
    %115 = math.tanh %114 : vector<2x128xf32>
    %cst_50 = arith.constant 1.000000e+00 : f32
    %116 = vector.broadcast %cst_50 : f32 to vector<2x128xf32>
    %117 = arith.addf %115, %116 : vector<2x128xf32>
    %cst_51 = arith.constant 5.000000e-01 : f32
    %118 = vector.broadcast %cst_51 : f32 to vector<2x128xf32>
    %119 = arith.mulf %118, %117 : vector<2x128xf32>
    %120 = arith.mulf %109, %81 : vector<2x128xf32>
    %121 = arith.mulf %101, %111 : vector<2x128xf32>
    %122 = arith.addf %120, %121 : vector<2x128xf32>
    %123 = math.tanh %122 : vector<2x128xf32>
    %124 = arith.mulf %119, %123 : vector<2x128xf32>
    %c2_52 = arith.constant 2 : index
    %c0_53 = arith.constant 0 : index
    %c0_54 = arith.constant 0 : index
    %125 = vector.load %arg3[%c2_52, %c0_53, %c0_54] : memref<8x2x128xf32, #tpu.memory_space<vmem>>, vector<1x2x128xf32>
    %126 = vector.shape_cast %125 : vector<1x2x128xf32> to vector<2x128xf32>
    %127 = vector.shape_cast %124 : vector<2x128xf32> to vector<1x2x128xf32>
    tpu.vector_store %arg3[%c2_52, %c0_53, %c0_54], %127 {strides = array<i32>} : memref<8x2x128xf32, #tpu.memory_space<vmem>>, vector<1x2x128xf32>,
    %c3 = arith.constant 3 : index
    %c0_55 = arith.constant 0 : index
    %c0_56 = arith.constant 0 : index
    %128 = vector.load %arg1[%c3, %c0_55, %c0_56] : memref<8x2x512xbf16, #tpu.memory_space<vmem>>, vector<1x2x512xbf16>
    %129 = vector.shape_cast %128 : vector<1x2x512xbf16> to vector<2x512xbf16>
    %130 = arith.extf %129 : vector<2x512xbf16> to vector<2x512xf32>
    %131 = arith.truncf %124 : vector<2x128xf32> to vector<2x128xbf16>
    %c0_57 = arith.constant 0 : index
    %c0_58 = arith.constant 0 : index
    %132 = vector.load %arg2[%c0_57, %c0_58] : memref<128x512xbf16, #tpu.memory_space<vmem>>, vector<128x512xbf16>
    %cst_59 = arith.constant dense<0.000000e+00> : vector<2x512xf32>
    %133 = tpu.matmul %131, %132, %cst_59 {dimension_numbers = #tpu.dot_dimension_numbers<[1], [0], [0], [1], [0, 0, 1, 1], [], []>} : vector<2x128xbf16>, vector<128x512xbf16>, vector<2x512xf32> -> vector<2x512xf32>
    %134 = arith.addf %130, %133 : vector<2x512xf32>
    %135 = vector.extract_strided_slice %134 {offsets = [0, 0], sizes = [2, 128], strides = [1, 1]} : vector<2x512xf32> to vector<2x128xf32>
    %cst_60 = arith.constant 5.000000e-01 : f32
    %136 = vector.broadcast %cst_60 : f32 to vector<2x128xf32>
    %137 = arith.mulf %136, %135 : vector<2x128xf32>
    %138 = math.tanh %137 : vector<2x128xf32>
    %cst_61 = arith.constant 1.000000e+00 : f32
    %139 = vector.broadcast %cst_61 : f32 to vector<2x128xf32>
    %140 = arith.addf %138, %139 : vector<2x128xf32>
    %cst_62 = arith.constant 5.000000e-01 : f32
    %141 = vector.broadcast %cst_62 : f32 to vector<2x128xf32>
    %142 = arith.mulf %141, %140 : vector<2x128xf32>
    %143 = vector.extract_strided_slice %134 {offsets = [0, 128], sizes = [2, 128], strides = [1, 1]} : vector<2x512xf32> to vector<2x128xf32>
    %cst_63 = arith.constant 5.000000e-01 : f32
    %144 = vector.broadcast %cst_63 : f32 to vector<2x128xf32>
    %145 = arith.mulf %144, %143 : vector<2x128xf32>
    %146 = math.tanh %145 : vector<2x128xf32>
    %cst_64 = arith.constant 1.000000e+00 : f32
    %147 = vector.broadcast %cst_64 : f32 to vector<2x128xf32>
    %148 = arith.addf %146, %147 : vector<2x128xf32>
    %cst_65 = arith.constant 5.000000e-01 : f32
    %149 = vector.broadcast %cst_65 : f32 to vector<2x128xf32>
    %150 = arith.mulf %149, %148 : vector<2x128xf32>
    %151 = vector.extract_strided_slice %134 {offsets = [0, 256], sizes = [2, 128], strides = [1, 1]} : vector<2x512xf32> to vector<2x128xf32>
    %152 = math.tanh %151 : vector<2x128xf32>
    %153 = vector.extract_strided_slice %134 {offsets = [0, 384], sizes = [2, 128], strides = [1, 1]} : vector<2x512xf32> to vector<2x128xf32>
    %cst_66 = arith.constant 5.000000e-01 : f32
    %154 = vector.broadcast %cst_66 : f32 to vector<2x128xf32>
    %155 = arith.mulf %154, %153 : vector<2x128xf32>
    %156 = math.tanh %155 : vector<2x128xf32>
    %cst_67 = arith.constant 1.000000e+00 : f32
    %157 = vector.broadcast %cst_67 : f32 to vector<2x128xf32>
    %158 = arith.addf %156, %157 : vector<2x128xf32>
    %cst_68 = arith.constant 5.000000e-01 : f32
    %159 = vector.broadcast %cst_68 : f32 to vector<2x128xf32>
    %160 = arith.mulf %159, %158 : vector<2x128xf32>
    %161 = arith.mulf %150, %122 : vector<2x128xf32>
    %162 = arith.mulf %142, %152 : vector<2x128xf32>
    %163 = arith.addf %161, %162 : vector<2x128xf32>
    %164 = math.tanh %163 : vector<2x128xf32>
    %165 = arith.mulf %160, %164 : vector<2x128xf32>
    %c3_69 = arith.constant 3 : index
    %c0_70 = arith.constant 0 : index
    %c0_71 = arith.constant 0 : index
    %166 = vector.load %arg3[%c3_69, %c0_70, %c0_71] : memref<8x2x128xf32, #tpu.memory_space<vmem>>, vector<1x2x128xf32>
    %167 = vector.shape_cast %166 : vector<1x2x128xf32> to vector<2x128xf32>
    %168 = vector.shape_cast %165 : vector<2x128xf32> to vector<1x2x128xf32>
    tpu.vector_store %arg3[%c3_69, %c0_70, %c0_71], %168 {strides = array<i32>} : memref<8x2x128xf32, #tpu.memory_space<vmem>>, vector<1x2x128xf32>,
    %c4 = arith.constant 4 : index
    %c0_72 = arith.constant 0 : index
    %c0_73 = arith.constant 0 : index
    %169 = vector.load %arg1[%c4, %c0_72, %c0_73] : memref<8x2x512xbf16, #tpu.memory_space<vmem>>, vector<1x2x512xbf16>
    %170 = vector.shape_cast %169 : vector<1x2x512xbf16> to vector<2x512xbf16>
    %171 = arith.extf %170 : vector<2x512xbf16> to vector<2x512xf32>
    %172 = arith.truncf %165 : vector<2x128xf32> to vector<2x128xbf16>
    %c0_74 = arith.constant 0 : index
    %c0_75 = arith.constant 0 : index
    %173 = vector.load %arg2[%c0_74, %c0_75] : memref<128x512xbf16, #tpu.memory_space<vmem>>, vector<128x512xbf16>
    %cst_76 = arith.constant dense<0.000000e+00> : vector<2x512xf32>
    %174 = tpu.matmul %172, %173, %cst_76 {dimension_numbers = #tpu.dot_dimension_numbers<[1], [0], [0], [1], [0, 0, 1, 1], [], []>} : vector<2x128xbf16>, vector<128x512xbf16>, vector<2x512xf32> -> vector<2x512xf32>
    %175 = arith.addf %171, %174 : vector<2x512xf32>
    %176 = vector.extract_strided_slice %175 {offsets = [0, 0], sizes = [2, 128], strides = [1, 1]} : vector<2x512xf32> to vector<2x128xf32>
    %cst_77 = arith.constant 5.000000e-01 : f32
    %177 = vector.broadcast %cst_77 : f32 to vector<2x128xf32>
    %178 = arith.mulf %177, %176 : vector<2x128xf32>
    %179 = math.tanh %178 : vector<2x128xf32>
    %cst_78 = arith.constant 1.000000e+00 : f32
    %180 = vector.broadcast %cst_78 : f32 to vector<2x128xf32>
    %181 = arith.addf %179, %180 : vector<2x128xf32>
    %cst_79 = arith.constant 5.000000e-01 : f32
    %182 = vector.broadcast %cst_79 : f32 to vector<2x128xf32>
    %183 = arith.mulf %182, %181 : vector<2x128xf32>
    %184 = vector.extract_strided_slice %175 {offsets = [0, 128], sizes = [2, 128], strides = [1, 1]} : vector<2x512xf32> to vector<2x128xf32>
    %cst_80 = arith.constant 5.000000e-01 : f32
    %185 = vector.broadcast %cst_80 : f32 to vector<2x128xf32>
    %186 = arith.mulf %185, %184 : vector<2x128xf32>
    %187 = math.tanh %186 : vector<2x128xf32>
    %cst_81 = arith.constant 1.000000e+00 : f32
    %188 = vector.broadcast %cst_81 : f32 to vector<2x128xf32>
    %189 = arith.addf %187, %188 : vector<2x128xf32>
    %cst_82 = arith.constant 5.000000e-01 : f32
    %190 = vector.broadcast %cst_82 : f32 to vector<2x128xf32>
    %191 = arith.mulf %190, %189 : vector<2x128xf32>
    %192 = vector.extract_strided_slice %175 {offsets = [0, 256], sizes = [2, 128], strides = [1, 1]} : vector<2x512xf32> to vector<2x128xf32>
    %193 = math.tanh %192 : vector<2x128xf32>
    %194 = vector.extract_strided_slice %175 {offsets = [0, 384], sizes = [2, 128], strides = [1, 1]} : vector<2x512xf32> to vector<2x128xf32>
    %cst_83 = arith.constant 5.000000e-01 : f32
    %195 = vector.broadcast %cst_83 : f32 to vector<2x128xf32>
    %196 = arith.mulf %195, %194 : vector<2x128xf32>
    %197 = math.tanh %196 : vector<2x128xf32>
    %cst_84 = arith.constant 1.000000e+00 : f32
    %198 = vector.broadcast %cst_84 : f32 to vector<2x128xf32>
    %199 = arith.addf %197, %198 : vector<2x128xf32>
    %cst_85 = arith.constant 5.000000e-01 : f32
    %200 = vector.broadcast %cst_85 : f32 to vector<2x128xf32>
    %201 = arith.mulf %200, %199 : vector<2x128xf32>
    %202 = arith.mulf %191, %163 : vector<2x128xf32>
    %203 = arith.mulf %183, %193 : vector<2x128xf32>
    %204 = arith.addf %202, %203 : vector<2x128xf32>
    %205 = math.tanh %204 : vector<2x128xf32>
    %206 = arith.mulf %201, %205 : vector<2x128xf32>
    %c4_86 = arith.constant 4 : index
    %c0_87 = arith.constant 0 : index
    %c0_88 = arith.constant 0 : index
    %207 = vector.load %arg3[%c4_86, %c0_87, %c0_88] : memref<8x2x128xf32, #tpu.memory_space<vmem>>, vector<1x2x128xf32>
    %208 = vector.shape_cast %207 : vector<1x2x128xf32> to vector<2x128xf32>
    %209 = vector.shape_cast %206 : vector<2x128xf32> to vector<1x2x128xf32>
    tpu.vector_store %arg3[%c4_86, %c0_87, %c0_88], %209 {strides = array<i32>} : memref<8x2x128xf32, #tpu.memory_space<vmem>>, vector<1x2x128xf32>,
    %c5 = arith.constant 5 : index
    %c0_89 = arith.constant 0 : index
    %c0_90 = arith.constant 0 : index
    %210 = vector.load %arg1[%c5, %c0_89, %c0_90] : memref<8x2x512xbf16, #tpu.memory_space<vmem>>, vector<1x2x512xbf16>
    %211 = vector.shape_cast %210 : vector<1x2x512xbf16> to vector<2x512xbf16>
    %212 = arith.extf %211 : vector<2x512xbf16> to vector<2x512xf32>
    %213 = arith.truncf %206 : vector<2x128xf32> to vector<2x128xbf16>
    %c0_91 = arith.constant 0 : index
    %c0_92 = arith.constant 0 : index
    %214 = vector.load %arg2[%c0_91, %c0_92] : memref<128x512xbf16, #tpu.memory_space<vmem>>, vector<128x512xbf16>
    %cst_93 = arith.constant dense<0.000000e+00> : vector<2x512xf32>
    %215 = tpu.matmul %213, %214, %cst_93 {dimension_numbers = #tpu.dot_dimension_numbers<[1], [0], [0], [1], [0, 0, 1, 1], [], []>} : vector<2x128xbf16>, vector<128x512xbf16>, vector<2x512xf32> -> vector<2x512xf32>
    %216 = arith.addf %212, %215 : vector<2x512xf32>
    %217 = vector.extract_strided_slice %216 {offsets = [0, 0], sizes = [2, 128], strides = [1, 1]} : vector<2x512xf32> to vector<2x128xf32>
    %cst_94 = arith.constant 5.000000e-01 : f32
    %218 = vector.broadcast %cst_94 : f32 to vector<2x128xf32>
    %219 = arith.mulf %218, %217 : vector<2x128xf32>
    %220 = math.tanh %219 : vector<2x128xf32>
    %cst_95 = arith.constant 1.000000e+00 : f32
    %221 = vector.broadcast %cst_95 : f32 to vector<2x128xf32>
    %222 = arith.addf %220, %221 : vector<2x128xf32>
    %cst_96 = arith.constant 5.000000e-01 : f32
    %223 = vector.broadcast %cst_96 : f32 to vector<2x128xf32>
    %224 = arith.mulf %223, %222 : vector<2x128xf32>
    %225 = vector.extract_strided_slice %216 {offsets = [0, 128], sizes = [2, 128], strides = [1, 1]} : vector<2x512xf32> to vector<2x128xf32>
    %cst_97 = arith.constant 5.000000e-01 : f32
    %226 = vector.broadcast %cst_97 : f32 to vector<2x128xf32>
    %227 = arith.mulf %226, %225 : vector<2x128xf32>
    %228 = math.tanh %227 : vector<2x128xf32>
    %cst_98 = arith.constant 1.000000e+00 : f32
    %229 = vector.broadcast %cst_98 : f32 to vector<2x128xf32>
    %230 = arith.addf %228, %229 : vector<2x128xf32>
    %cst_99 = arith.constant 5.000000e-01 : f32
    %231 = vector.broadcast %cst_99 : f32 to vector<2x128xf32>
    %232 = arith.mulf %231, %230 : vector<2x128xf32>
    %233 = vector.extract_strided_slice %216 {offsets = [0, 256], sizes = [2, 128], strides = [1, 1]} : vector<2x512xf32> to vector<2x128xf32>
    %234 = math.tanh %233 : vector<2x128xf32>
    %235 = vector.extract_strided_slice %216 {offsets = [0, 384], sizes = [2, 128], strides = [1, 1]} : vector<2x512xf32> to vector<2x128xf32>
    %cst_100 = arith.constant 5.000000e-01 : f32
    %236 = vector.broadcast %cst_100 : f32 to vector<2x128xf32>
    %237 = arith.mulf %236, %235 : vector<2x128xf32>
    %238 = math.tanh %237 : vector<2x128xf32>
    %cst_101 = arith.constant 1.000000e+00 : f32
    %239 = vector.broadcast %cst_101 : f32 to vector<2x128xf32>
    %240 = arith.addf %238, %239 : vector<2x128xf32>
    %cst_102 = arith.constant 5.000000e-01 : f32
    %241 = vector.broadcast %cst_102 : f32 to vector<2x128xf32>
    %242 = arith.mulf %241, %240 : vector<2x128xf32>
    %243 = arith.mulf %232, %204 : vector<2x128xf32>
    %244 = arith.mulf %224, %234 : vector<2x128xf32>
    %245 = arith.addf %243, %244 : vector<2x128xf32>
    %246 = math.tanh %245 : vector<2x128xf32>
    %247 = arith.mulf %242, %246 : vector<2x128xf32>
    %c5_103 = arith.constant 5 : index
    %c0_104 = arith.constant 0 : index
    %c0_105 = arith.constant 0 : index
    %248 = vector.load %arg3[%c5_103, %c0_104, %c0_105] : memref<8x2x128xf32, #tpu.memory_space<vmem>>, vector<1x2x128xf32>
    %249 = vector.shape_cast %248 : vector<1x2x128xf32> to vector<2x128xf32>
    %250 = vector.shape_cast %247 : vector<2x128xf32> to vector<1x2x128xf32>
    tpu.vector_store %arg3[%c5_103, %c0_104, %c0_105], %250 {strides = array<i32>} : memref<8x2x128xf32, #tpu.memory_space<vmem>>, vector<1x2x128xf32>,
    %c6 = arith.constant 6 : index
    %c0_106 = arith.constant 0 : index
    %c0_107 = arith.constant 0 : index
    %251 = vector.load %arg1[%c6, %c0_106, %c0_107] : memref<8x2x512xbf16, #tpu.memory_space<vmem>>, vector<1x2x512xbf16>
    %252 = vector.shape_cast %251 : vector<1x2x512xbf16> to vector<2x512xbf16>
    %253 = arith.extf %252 : vector<2x512xbf16> to vector<2x512xf32>
    %254 = arith.truncf %247 : vector<2x128xf32> to vector<2x128xbf16>
    %c0_108 = arith.constant 0 : index
    %c0_109 = arith.constant 0 : index
    %255 = vector.load %arg2[%c0_108, %c0_109] : memref<128x512xbf16, #tpu.memory_space<vmem>>, vector<128x512xbf16>
    %cst_110 = arith.constant dense<0.000000e+00> : vector<2x512xf32>
    %256 = tpu.matmul %254, %255, %cst_110 {dimension_numbers = #tpu.dot_dimension_numbers<[1], [0], [0], [1], [0, 0, 1, 1], [], []>} : vector<2x128xbf16>, vector<128x512xbf16>, vector<2x512xf32> -> vector<2x512xf32>
    %257 = arith.addf %253, %256 : vector<2x512xf32>
    %258 = vector.extract_strided_slice %257 {offsets = [0, 0], sizes = [2, 128], strides = [1, 1]} : vector<2x512xf32> to vector<2x128xf32>
    %cst_111 = arith.constant 5.000000e-01 : f32
    %259 = vector.broadcast %cst_111 : f32 to vector<2x128xf32>
    %260 = arith.mulf %259, %258 : vector<2x128xf32>
    %261 = math.tanh %260 : vector<2x128xf32>
    %cst_112 = arith.constant 1.000000e+00 : f32
    %262 = vector.broadcast %cst_112 : f32 to vector<2x128xf32>
    %263 = arith.addf %261, %262 : vector<2x128xf32>
    %cst_113 = arith.constant 5.000000e-01 : f32
    %264 = vector.broadcast %cst_113 : f32 to vector<2x128xf32>
    %265 = arith.mulf %264, %263 : vector<2x128xf32>
    %266 = vector.extract_strided_slice %257 {offsets = [0, 128], sizes = [2, 128], strides = [1, 1]} : vector<2x512xf32> to vector<2x128xf32>
    %cst_114 = arith.constant 5.000000e-01 : f32
    %267 = vector.broadcast %cst_114 : f32 to vector<2x128xf32>
    %268 = arith.mulf %267, %266 : vector<2x128xf32>
    %269 = math.tanh %268 : vector<2x128xf32>
    %cst_115 = arith.constant 1.000000e+00 : f32
    %270 = vector.broadcast %cst_115 : f32 to vector<2x128xf32>
    %271 = arith.addf %269, %270 : vector<2x128xf32>
    %cst_116 = arith.constant 5.000000e-01 : f32
    %272 = vector.broadcast %cst_116 : f32 to vector<2x128xf32>
    %273 = arith.mulf %272, %271 : vector<2x128xf32>
    %274 = vector.extract_strided_slice %257 {offsets = [0, 256], sizes = [2, 128], strides = [1, 1]} : vector<2x512xf32> to vector<2x128xf32>
    %275 = math.tanh %274 : vector<2x128xf32>
    %276 = vector.extract_strided_slice %257 {offsets = [0, 384], sizes = [2, 128], strides = [1, 1]} : vector<2x512xf32> to vector<2x128xf32>
    %cst_117 = arith.constant 5.000000e-01 : f32
    %277 = vector.broadcast %cst_117 : f32 to vector<2x128xf32>
    %278 = arith.mulf %277, %276 : vector<2x128xf32>
    %279 = math.tanh %278 : vector<2x128xf32>
    %cst_118 = arith.constant 1.000000e+00 : f32
    %280 = vector.broadcast %cst_118 : f32 to vector<2x128xf32>
    %281 = arith.addf %279, %280 : vector<2x128xf32>
    %cst_119 = arith.constant 5.000000e-01 : f32
    %282 = vector.broadcast %cst_119 : f32 to vector<2x128xf32>
    %283 = arith.mulf %282, %281 : vector<2x128xf32>
    %284 = arith.mulf %273, %245 : vector<2x128xf32>
    %285 = arith.mulf %265, %275 : vector<2x128xf32>
    %286 = arith.addf %284, %285 : vector<2x128xf32>
    %287 = math.tanh %286 : vector<2x128xf32>
    %288 = arith.mulf %283, %287 : vector<2x128xf32>
    %c6_120 = arith.constant 6 : index
    %c0_121 = arith.constant 0 : index
    %c0_122 = arith.constant 0 : index
    %289 = vector.load %arg3[%c6_120, %c0_121, %c0_122] : memref<8x2x128xf32, #tpu.memory_space<vmem>>, vector<1x2x128xf32>
    %290 = vector.shape_cast %289 : vector<1x2x128xf32> to vector<2x128xf32>
    %291 = vector.shape_cast %288 : vector<2x128xf32> to vector<1x2x128xf32>
    tpu.vector_store %arg3[%c6_120, %c0_121, %c0_122], %291 {strides = array<i32>} : memref<8x2x128xf32, #tpu.memory_space<vmem>>, vector<1x2x128xf32>,
    %c7 = arith.constant 7 : index
    %c0_123 = arith.constant 0 : index
    %c0_124 = arith.constant 0 : index
    %292 = vector.load %arg1[%c7, %c0_123, %c0_124] : memref<8x2x512xbf16, #tpu.memory_space<vmem>>, vector<1x2x512xbf16>
    %293 = vector.shape_cast %292 : vector<1x2x512xbf16> to vector<2x512xbf16>
    %294 = arith.extf %293 : vector<2x512xbf16> to vector<2x512xf32>
    %295 = arith.truncf %288 : vector<2x128xf32> to vector<2x128xbf16>
    %c0_125 = arith.constant 0 : index
    %c0_126 = arith.constant 0 : index
    %296 = vector.load %arg2[%c0_125, %c0_126] : memref<128x512xbf16, #tpu.memory_space<vmem>>, vector<128x512xbf16>
    %cst_127 = arith.constant dense<0.000000e+00> : vector<2x512xf32>
    %297 = tpu.matmul %295, %296, %cst_127 {dimension_numbers = #tpu.dot_dimension_numbers<[1], [0], [0], [1], [0, 0, 1, 1], [], []>} : vector<2x128xbf16>, vector<128x512xbf16>, vector<2x512xf32> -> vector<2x512xf32>
    %298 = arith.addf %294, %297 : vector<2x512xf32>
    %299 = vector.extract_strided_slice %298 {offsets = [0, 0], sizes = [2, 128], strides = [1, 1]} : vector<2x512xf32> to vector<2x128xf32>
    %cst_128 = arith.constant 5.000000e-01 : f32
    %300 = vector.broadcast %cst_128 : f32 to vector<2x128xf32>
    %301 = arith.mulf %300, %299 : vector<2x128xf32>
    %302 = math.tanh %301 : vector<2x128xf32>
    %cst_129 = arith.constant 1.000000e+00 : f32
    %303 = vector.broadcast %cst_129 : f32 to vector<2x128xf32>
    %304 = arith.addf %302, %303 : vector<2x128xf32>
    %cst_130 = arith.constant 5.000000e-01 : f32
    %305 = vector.broadcast %cst_130 : f32 to vector<2x128xf32>
    %306 = arith.mulf %305, %304 : vector<2x128xf32>
    %307 = vector.extract_strided_slice %298 {offsets = [0, 128], sizes = [2, 128], strides = [1, 1]} : vector<2x512xf32> to vector<2x128xf32>
    %cst_131 = arith.constant 5.000000e-01 : f32
    %308 = vector.broadcast %cst_131 : f32 to vector<2x128xf32>
    %309 = arith.mulf %308, %307 : vector<2x128xf32>
    %310 = math.tanh %309 : vector<2x128xf32>
    %cst_132 = arith.constant 1.000000e+00 : f32
    %311 = vector.broadcast %cst_132 : f32 to vector<2x128xf32>
    %312 = arith.addf %310, %311 : vector<2x128xf32>
    %cst_133 = arith.constant 5.000000e-01 : f32
    %313 = vector.broadcast %cst_133 : f32 to vector<2x128xf32>
    %314 = arith.mulf %313, %312 : vector<2x128xf32>
    %315 = vector.extract_strided_slice %298 {offsets = [0, 256], sizes = [2, 128], strides = [1, 1]} : vector<2x512xf32> to vector<2x128xf32>
    %316 = math.tanh %315 : vector<2x128xf32>
    %317 = vector.extract_strided_slice %298 {offsets = [0, 384], sizes = [2, 128], strides = [1, 1]} : vector<2x512xf32> to vector<2x128xf32>
    %cst_134 = arith.constant 5.000000e-01 : f32
    %318 = vector.broadcast %cst_134 : f32 to vector<2x128xf32>
    %319 = arith.mulf %318, %317 : vector<2x128xf32>
    %320 = math.tanh %319 : vector<2x128xf32>
    %cst_135 = arith.constant 1.000000e+00 : f32
    %321 = vector.broadcast %cst_135 : f32 to vector<2x128xf32>
    %322 = arith.addf %320, %321 : vector<2x128xf32>
    %cst_136 = arith.constant 5.000000e-01 : f32
    %323 = vector.broadcast %cst_136 : f32 to vector<2x128xf32>
    %324 = arith.mulf %323, %322 : vector<2x128xf32>
    %325 = arith.mulf %314, %286 : vector<2x128xf32>
    %326 = arith.mulf %306, %316 : vector<2x128xf32>
    %327 = arith.addf %325, %326 : vector<2x128xf32>
    %328 = math.tanh %327 : vector<2x128xf32>
    %329 = arith.mulf %324, %328 : vector<2x128xf32>
    %c7_137 = arith.constant 7 : index
    %c0_138 = arith.constant 0 : index
    %c0_139 = arith.constant 0 : index
    %330 = vector.load %arg3[%c7_137, %c0_138, %c0_139] : memref<8x2x128xf32, #tpu.memory_space<vmem>>, vector<1x2x128xf32>
    %331 = vector.shape_cast %330 : vector<1x2x128xf32> to vector<2x128xf32>
    %332 = vector.shape_cast %329 : vector<2x128xf32> to vector<1x2x128xf32>
    tpu.vector_store %arg3[%c7_137, %c0_138, %c0_139], %332 {strides = array<i32>} : memref<8x2x128xf32, #tpu.memory_space<vmem>>, vector<1x2x128xf32>,
    %c0_140 = arith.constant 0 : index
    %c0_141 = arith.constant 0 : index
    %333 = vector.load %arg4[%c0_140, %c0_141] : memref<2x128xf32, #tpu.memory_space<vmem>>, vector<2x128xf32>
    tpu.vector_store %arg4[%c0_140, %c0_141], %329 {strides = array<i32>} : memref<2x128xf32, #tpu.memory_space<vmem>>, vector<2x128xf32>,
    %c0_142 = arith.constant 0 : index
    %c0_143 = arith.constant 0 : index
    %334 = vector.load %arg5[%c0_142, %c0_143] : memref<2x128xf32, #tpu.memory_space<vmem>>, vector<2x128xf32>
    tpu.vector_store %arg5[%c0_142, %c0_143], %327 {strides = array<i32>} : memref<2x128xf32, #tpu.memory_space<vmem>>, vector<2x128xf32>,
    return
  }
  func.func @transform_0(%arg0: i32) -> (i32, i32, i32) {
    %c0_i32 = arith.constant 0 : i32
    %c0_i32_0 = arith.constant 0 : i32
    %c0_i32_1 = arith.constant 0 : i32
    return %arg0, %c0_i32, %c0_i32_0 : i32, i32, i32
  }
  func.func @transform_1(%arg0: i32) -> (i32, i32) {
    %c0_i32 = arith.constant 0 : i32
    %c0_i32_0 = arith.constant 0 : i32
    %c0_i32_1 = arith.constant 0 : i32
    return %c0_i32, %c0_i32_0 : i32, i32
  }
  func.func @transform_2(%arg0: i32) -> (i32, i32, i32) {
    %c0_i32 = arith.constant 0 : i32
    %c0_i32_0 = arith.constant 0 : i32
    %c0_i32_1 = arith.constant 0 : i32
    return %arg0, %c0_i32, %c0_i32_0 : i32, i32, i32
  }
  func.func @transform_3(%arg0: i32) -> (i32, i32) {
    %c0_i32 = arith.constant 0 : i32
    %c0_i32_0 = arith.constant 0 : i32
    %c0_i32_1 = arith.constant 0 : i32
    return %c0_i32, %c0_i32_0 : i32, i32
  }
  func.func @transform_4(%arg0: i32) -> (i32, i32) {
    %c0_i32 = arith.constant 0 : i32
    %c0_i32_0 = arith.constant 0 : i32
    %c0_i32_1 = arith.constant 0 : i32
    return %c0_i32, %c0_i32_0 : i32, i32
  }
}

</mosaic_0001>

<llo_original>
// kernel: lstm_forward.1
$region0: #{lstm_forward.1}
  #allocation0 [shape = 'u32[]', space=smem, size = 0x4, offset = 0x4, fixed_abs, tag = 'smem constant byte address 0x4 - core index']
  #allocation1 [shape = 'u32[144,128]{1,0:T(1,128)}', space=vmem, size = 0x12000, scoped, tag = 'internal scratch']
  %s0 = inlined_call_operand.vmem [shape: bf16[8,2,512], index: 0, kind: input, shape index: {}]
  %s1 = inlined_call_operand.vmem [shape: bf16[128,512], index: 1, kind: input, shape index: {}]
  %s2 = inlined_call_operand.vmem [shape: f32[8,2,128], index: 2, kind: output, shape index: {0}]
  %s3 = inlined_call_operand.hbm [shape: f32[2,128], index: 3, kind: output, shape index: {1}]
  %s4 = inlined_call_operand.hbm [shape: f32[2,128], index: 4, kind: output, shape index: {2}]
  %5 = xla_tuple %s2, %s3, %s4
  %s6 = sld [smem:[#allocation0]]
  $region38: #{lstm_forward.1} parent=0
    _
  %s8 = ssub.s32 1, %s6
  %s9 = scalar_select 0, %s8, %s6
  $region1: #{lstm_forward.1} parent=0
    #allocation2 [shape = 'u8[1024]{0}', space=vmem, size = 0x400, scoped, tag = 'output window, operand 1, single buffered']
    #allocation3 [shape = 's32[1]{0}', space=sflag, size = 0x4, scoped, tag = 'scoped memory for lstm_forward.1']
    #allocation4 [shape = 'u8[1024]{0}', space=vmem, size = 0x400, scoped, tag = 'output window, operand 2, single buffered']
    #allocation5 [shape = 's32[1]{0}', space=sflag, size = 0x4, scoped, tag = 'scoped memory for lstm_forward.1']
    %10 = vsyncpa [#allocation3], 0
    %11 = vsyncpa [#allocation5], 0
    // Predicated region
    $region2: #{lstm_forward.1} parent=1 // pred_check
      _
    $region3: #{lstm_forward.1} parent=1 // pred_check_branch
      %13 = sbr.rel (0) target = $region5
    $region4: #{lstm_forward.1} parent=1 // pred_region
      _
    $region5: #{lstm_forward.1} parent=1 // pred_fallthru
      _
    // Predicated region
    $region6: #{lstm_forward.1} parent=1 // pred_check
      _
    $region7: #{lstm_forward.1} parent=1 // pred_check_branch
      %15 = sbr.rel (0) target = $region9
    $region8: #{lstm_forward.1} parent=1 // pred_region
      _
    $region9: #{lstm_forward.1} parent=1 // pred_fallthru
      _
    %p17 = scmp.eq.s32.totalorder 0, 0
    // Predicated region
    $region10: #{lstm_forward.1} parent=1 // pred_check
      %p18 = pneg %p17
    $region11: #{lstm_forward.1} parent=1 // pred_check_branch
      %20 = sbr.rel (%p18) target = $region13
    $region12: #{lstm_forward.1} parent=1 // pred_region
      %21 = vst [vmem:[#allocation2] sm:$0x3] 0.0
      %22 = vst [vmem:[#allocation4] sm:$0x3] 0.0
    $region13: #{lstm_forward.1} parent=1 // pred_fallthru
      _
    %v23 = vld [vmem:[#allocation2] sm:$0x3]
    %v24 = vld [vmem:[#allocation4] sm:$0x3]
    %v25 = vld [vmem:[%s0] sm:$0xf]
    %v26 = vunpack.c.l.bf16 %v25
    %v27 = vpack.c.bf16 %v23, %v23
    %v28 = vld [vmem:[%s1] sm:$0xff]
    %v29 = vld [vmem:[%s1 + $0x8] sm:$0xff]
    %v30 = vld [vmem:[%s1 + $0x10] sm:$0xff]
    %v31 = vld [vmem:[%s1 + $0x18] sm:$0xff]
    %v32 = vld [vmem:[%s1 + $0x20] sm:$0xff]
    %v33 = vld [vmem:[%s1 + $0x28] sm:$0xff]
    %v34 = vld [vmem:[%s1 + $0x30] sm:$0xff]
    %v35 = vld [vmem:[%s1 + $0x38] sm:$0xff]
    %v36 = vld [vmem:[%s1 + $0x40] sm:$0xff]
    %v37 = vld [vmem:[%s1 + $0x48] sm:$0xff]
    %v38 = vld [vmem:[%s1 + $0x50] sm:$0xff]
    %v39 = vld [vmem:[%s1 + $0x58] sm:$0xff]
    %v40 = vld [vmem:[%s1 + $0x60] sm:$0xff]
    %v41 = vld [vmem:[%s1 + $0x68] sm:$0xff]
    %v42 = vld [vmem:[%s1 + $0x70] sm:$0xff]
    %v43 = vld [vmem:[%s1 + $0x78] sm:$0xff]
    %v44 = vld [vmem:[%s1 + $0x80] sm:$0xff]
    %v45 = vld [vmem:[%s1 + $0x88] sm:$0xff]
    %v46 = vld [vmem:[%s1 + $0x90] sm:$0xff]
    %v47 = vld [vmem:[%s1 + $0x98] sm:$0xff]
    %v48 = vld [vmem:[%s1 + $0xa0] sm:$0xff]
    %v49 = vld [vmem:[%s1 + $0xa8] sm:$0xff]
    %v50 = vld [vmem:[%s1 + $0xb0] sm:$0xff]
    %v51 = vld [vmem:[%s1 + $0xb8] sm:$0xff]
    %v52 = vld [vmem:[%s1 + $0xc0] sm:$0xff]
    %v53 = vld [vmem:[%s1 + $0xc8] sm:$0xff]
    %v54 = vld [vmem:[%s1 + $0xd0] sm:$0xff]
    %v55 = vld [vmem:[%s1 + $0xd8] sm:$0xff]
    %v56 = vld [vmem:[%s1 + $0xe0] sm:$0xff]
    %v57 = vld [vmem:[%s1 + $0xe8] sm:$0xff]
    %v58 = vld [vmem:[%s1 + $0xf0] sm:$0xff]
    %v59 = vld [vmem:[%s1 + $0xf8] sm:$0xff]
    %v92 = vunpack.c.l.b16 %v28
    %v93 = vunpack.c.h.b16 %v28
    %v94 = vunpack.c.l.b16 %v29
    %v95 = vunpack.c.h.b16 %v29
    %v96 = vunpack.c.l.b16 %v30
    %v97 = vunpack.c.h.b16 %v30
    %v98 = vunpack.c.l.b16 %v31
    %v99 = vunpack.c.h.b16 %v31
    %v100 = vunpack.c.l.b16 %v32
    %v101 = vunpack.c.h.b16 %v32
    %v102 = vunpack.c.l.b16 %v33
    %v103 = vunpack.c.h.b16 %v33
    %v104 = vunpack.c.l.b16 %v34
    %v105 = vunpack.c.h.b16 %v34
    %v106 = vunpack.c.l.b16 %v35
    %v107 = vunpack.c.h.b16 %v35
    %v108 = vunpack.c.l.b16 %v36
    %v109 = vunpack.c.h.b16 %v36
    %v110 = vunpack.c.l.b16 %v37
    %v111 = vunpack.c.h.b16 %v37
    %v112 = vunpack.c.l.b16 %v38
    %v113 = vunpack.c.h.b16 %v38
    %v114 = vunpack.c.l.b16 %v39
    %v115 = vunpack.c.h.b16 %v39
    %v116 = vunpack.c.l.b16 %v40
    %v117 = vunpack.c.h.b16 %v40
    %v118 = vunpack.c.l.b16 %v41
    %v119 = vunpack.c.h.b16 %v41
    %v120 = vunpack.c.l.b16 %v42
    %v121 = vunpack.c.h.b16 %v42
    %v122 = vunpack.c.l.b16 %v43
    %v123 = vunpack.c.h.b16 %v43
    %v124 = vunpack.c.l.b16 %v44
    %v125 = vunpack.c.h.b16 %v44
    %v126 = vunpack.c.l.b16 %v45
    %v127 = vunpack.c.h.b16 %v45
    %v128 = vunpack.c.l.b16 %v46
    %v129 = vunpack.c.h.b16 %v46
    %v130 = vunpack.c.l.b16 %v47
    %v131 = vunpack.c.h.b16 %v47
    %v132 = vunpack.c.l.b16 %v48
    %v133 = vunpack.c.h.b16 %v48
    %v134 = vunpack.c.l.b16 %v49
    %v135 = vunpack.c.h.b16 %v49
    %v136 = vunpack.c.l.b16 %v50
    %v137 = vunpack.c.h.b16 %v50
    %v138 = vunpack.c.l.b16 %v51
    %v139 = vunpack.c.h.b16 %v51
    %v140 = vunpack.c.l.b16 %v52
    %v141 = vunpack.c.h.b16 %v52
    %v142 = vunpack.c.l.b16 %v53
    %v143 = vunpack.c.h.b16 %v53
    %v144 = vunpack.c.l.b16 %v54
    %v145 = vunpack.c.h.b16 %v54
    %v146 = vunpack.c.l.b16 %v55
    %v147 = vunpack.c.h.b16 %v55
    %v148 = vunpack.c.l.b16 %v56
    %v149 = vunpack.c.h.b16 %v56
    %v150 = vunpack.c.l.b16 %v57
    %v151 = vunpack.c.h.b16 %v57
    %v152 = vunpack.c.l.b16 %v58
    %v153 = vunpack.c.h.b16 %v58
    %v154 = vunpack.c.l.b16 %v59
    %v155 = vunpack.c.h.b16 %v59
    %v156 = vpack.c.b16 %v96, %v92
    %v157 = vpack.c.b16 %v97, %v93
    %v158 = vpack.c.b16 %v98, %v94
    %v159 = vpack.c.b16 %v99, %v95
    %v160 = vpack.c.b16 %v104, %v100
    %v161 = vpack.c.b16 %v105, %v101
    %v162 = vpack.c.b16 %v106, %v102
    %v163 = vpack.c.b16 %v107, %v103
    %v164 = vpack.c.b16 %v112, %v108
    %v165 = vpack.c.b16 %v113, %v109
    %v166 = vpack.c.b16 %v114, %v110
    %v167 = vpack.c.b16 %v115, %v111
    %v168 = vpack.c.b16 %v120, %v116
    %v169 = vpack.c.b16 %v121, %v117
    %v170 = vpack.c.b16 %v122, %v118
    %v171 = vpack.c.b16 %v123, %v119
    %v172 = vpack.c.b16 %v128, %v124
    %v173 = vpack.c.b16 %v129, %v125
    %v174 = vpack.c.b16 %v130, %v126
    %v175 = vpack.c.b16 %v131, %v127
    %v176 = vpack.c.b16 %v136, %v132
    %v177 = vpack.c.b16 %v137, %v133
    %v178 = vpack.c.b16 %v138, %v134
    %v179 = vpack.c.b16 %v139, %v135
    %v180 = vpack.c.b16 %v144, %v140
    %v181 = vpack.c.b16 %v145, %v141
    %v182 = vpack.c.b16 %v146, %v142
    %v183 = vpack.c.b16 %v147, %v143
    %v184 = vpack.c.b16 %v152, %v148
    %v185 = vpack.c.b16 %v153, %v149
    %v186 = vpack.c.b16 %v154, %v150
    %v187 = vpack.c.b16 %v155, %v151
    %220 = vmatprep.subr.bf16.mxu0 %v157
    %221 = vmatpush1.bf16.msra.mxu0 %v156
    %222 = vmatprep.subr.bf16.mxu0 %v161
    %223 = vmatpush1.bf16.msra.mxu0 %v160
    %224 = vmatprep.subr.bf16.mxu0 %v165
    %225 = vmatpush1.bf16.msra.mxu0 %v164
    %226 = vmatprep.subr.bf16.mxu0 %v169
    %227 = vmatpush1.bf16.msra.mxu0 %v168
    %228 = vmatprep.subr.bf16.mxu0 %v173
    %229 = vmatpush1.bf16.msra.mxu0 %v172
    %230 = vmatprep.subr.bf16.mxu0 %v177
    %231 = vmatpush1.bf16.msra.mxu0 %v176
    %232 = vmatprep.subr.bf16.mxu0 %v181
    %233 = vmatpush1.bf16.msra.mxu0 %v180
    %234 = vmatprep.subr.bf16.mxu0 %v185
    %235 = vmatpush1.bf16.msra.mxu0 %v184
    %236 = vmatprep.subr.bf16.mxu0 0
    %237 = vmatpush1.bf16.msra.mxu0 0
    %238 = vmatprep.subr.bf16.mxu0 0
    %239 = vmatpush1.bf16.msra.mxu0 0
    %240 = vmatprep.subr.bf16.mxu0 0
    %241 = vmatpush1.bf16.msra.mxu0 0
    %242 = vmatprep.subr.bf16.mxu0 0
    %243 = vmatpush1.bf16.msra.mxu0 0
    %244 = vmatprep.subr.bf16.mxu0 0
    %245 = vmatpush1.bf16.msra.mxu0 0
    %246 = vmatprep.subr.bf16.mxu0 0
    %247 = vmatpush1.bf16.msra.mxu0 0
    %248 = vmatprep.subr.bf16.mxu0 0
    %249 = vmatpush1.bf16.msra.mxu0 0
    %250 = vmatprep.subr.bf16.mxu0 0
    %251 = vmatpush1.bf16.msra.mxu0 0
    %252 = vmatprep.mubr.bf16.mxu0 0
    %253 = vmatmul.mubr.bf16.gmra.mrb[0].mxu0 %v27
    %v254 = vpop.f32.mrb[0].mxu0
    %v255 = vadd.f32 0.0, %v254
    %v256 = vpop.f32.mrb[0].mxu0
    %v257 = vadd.f32 0.0, %v256
    %v258 = vpop.f32.mrb[0].mxu0
    %v259 = vpop.f32.mrb[0].mxu0
    %260 = vdwg.mxu0
    %261 = vmatprep.subr.bf16.mxu0 %v159
    %262 = vmatpush1.bf16.msra.mxu0 %v158
    %263 = vmatprep.subr.bf16.mxu0 %v163
    %264 = vmatpush1.bf16.msra.mxu0 %v162
    %265 = vmatprep.subr.bf16.mxu0 %v167
    %266 = vmatpush1.bf16.msra.mxu0 %v166
    %267 = vmatprep.subr.bf16.mxu0 %v171
    %268 = vmatpush1.bf16.msra.mxu0 %v170
    %269 = vmatprep.subr.bf16.mxu0 %v175
    %270 = vmatpush1.bf16.msra.mxu0 %v174
    %271 = vmatprep.subr.bf16.mxu0 %v179
    %272 = vmatpush1.bf16.msra.mxu0 %v178
    %273 = vmatprep.subr.bf16.mxu0 %v183
    %274 = vmatpush1.bf16.msra.mxu0 %v182
    %275 = vmatprep.subr.bf16.mxu0 %v187
    %276 = vmatpush1.bf16.msra.mxu0 %v186
    %277 = vmatprep.subr.bf16.mxu0 0
    %278 = vmatpush1.bf16.msra.mxu0 0
    %279 = vmatprep.subr.bf16.mxu0 0
    %280 = vmatpush1.bf16.msra.mxu0 0
    %281 = vmatprep.subr.bf16.mxu0 0
    %282 = vmatpush1.bf16.msra.mxu0 0
    %283 = vmatprep.subr.bf16.mxu0 0
    %284 = vmatpush1.bf16.msra.mxu0 0
    %285 = vmatprep.subr.bf16.mxu0 0
    %286 = vmatpush1.bf16.msra.mxu0 0
    %287 = vmatprep.subr.bf16.mxu0 0
    %288 = vmatpush1.bf16.msra.mxu0 0
    %289 = vmatprep.subr.bf16.mxu0 0
    %290 = vmatpush1.bf16.msra.mxu0 0
    %291 = vmatprep.subr.bf16.mxu0 0
    %292 = vmatpush1.bf16.msra.mxu0 0
    %293 = vmatprep.mubr.bf16.mxu0 0
    %294 = vmatmul.mubr.bf16.gmra.mrb[0].mxu0 %v27
    %v295 = vpop.f32.mrb[0].mxu0
    %v296 = vadd.f32 0.0, %v295
    %v297 = vpop.f32.mrb[0].mxu0
    %v298 = vadd.f32 0.0, %v297
    %v299 = vpop.f32.mrb[0].mxu0
    %v300 = vpop.f32.mrb[0].mxu0
    %301 = vdwg.mxu0
    %v306 = vcombine.low %v255, %v257
    %v307 = vcombine.low %v296, %v298
    %v309 = vunpack.c.l.s4 1983009808
    %v310 = vunpack.c.0.s8 %v309
    %v311 = vlaneseq
    %v312 = vshrl.u32 %v311, 7
    %v313 = vsub.s32 %v310, %v312
    %v314 = vrot.slane %v306, %v313
    %v316 = vunpack.c.l.s4 1983009808
    %v317 = vunpack.c.0.s8 %v316
    %v318 = vlaneseq
    %v319 = vshrl.u32 %v318, 7
    %v320 = vsub.s32 %v317, %v319
    %v321 = vrot.slane %v307, %v320
    %v322 = vcombine.low %v314, %v321
    %v324 = vadd.f32 %v26, %v322
    %v325 = vmul.f32 %v324, 0.5
    %v326 = vtanh.pop %v325
    %v327 = vadd.f32 %v326, 1.0
    %v328 = vmul.f32 %v327, 0.5
    %v330 = vrot.slane %v324, 2
    %v332 = vmul.f32 %v330, 0.5
    %v333 = vtanh.pop %v332
    %v334 = vadd.f32 %v333, 1.0
    %v335 = vmul.f32 %v334, 0.5
    %v336 = vrot.slane %v324, 4
    %v338 = vtanh.pop %v336
    %v339 = vrot.slane %v324, 6
    %v341 = vmul.f32 %v339, 0.5
    %v342 = vtanh.pop %v341
    %v343 = vadd.f32 %v342, 1.0
    %v344 = vmul.f32 %v343, 0.5
    %v345 = vmul.f32 %v335, %v24
    %v346 = vmul.f32 %v328, %v338
    %v347 = vadd.f32 %v345, %v346
    %v348 = vtanh.pop %v347
    %v349 = vmul.f32 %v344, %v348
    %350 = vst [vmem:[%s2] sm:$0x3] %v349
    %s351 = scalar_lea.vmem %s0, 4
    %v352 = vld [vmem:[%s351] sm:$0xf]
    %v353 = vunpack.c.l.bf16 %v352
    %v354 = vpack.c.bf16 %v349, %v349
    %v355 = vld [vmem:[%s1] sm:$0xff]
    %v356 = vld [vmem:[%s1 + $0x8] sm:$0xff]
    %v357 = vld [vmem:[%s1 + $0x10] sm:$0xff]
    %v358 = vld [vmem:[%s1 + $0x18] sm:$0xff]
    %v359 = vld [vmem:[%s1 + $0x20] sm:$0xff]
    %v360 = vld [vmem:[%s1 + $0x28] sm:$0xff]
    %v361 = vld [vmem:[%s1 + $0x30] sm:$0xff]
    %v362 = vld [vmem:[%s1 + $0x38] sm:$0xff]
    %v363 = vld [vmem:[%s1 + $0x40] sm:$0xff]
    %v364 = vld [vmem:[%s1 + $0x48] sm:$0xff]
    %v365 = vld [vmem:[%s1 + $0x50] sm:$0xff]
    %v366 = vld [vmem:[%s1 + $0x58] sm:$0xff]
    %v367 = vld [vmem:[%s1 + $0x60] sm:$0xff]
    %v368 = vld [vmem:[%s1 + $0x68] sm:$0xff]
    %v369 = vld [vmem:[%s1 + $0x70] sm:$0xff]
    %v370 = vld [vmem:[%s1 + $0x78] sm:$0xff]
    %v371 = vld [vmem:[%s1 + $0x80] sm:$0xff]
    %v372 = vld [vmem:[%s1 + $0x88] sm:$0xff]
    %v373 = vld [vmem:[%s1 + $0x90] sm:$0xff]
    %v374 = vld [vmem:[%s1 + $0x98] sm:$0xff]
    %v375 = vld [vmem:[%s1 + $0xa0] sm:$0xff]
    %v376 = vld [vmem:[%s1 + $0xa8] sm:$0xff]
    %v377 = vld [vmem:[%s1 + $0xb0] sm:$0xff]
    %v378 = vld [vmem:[%s1 + $0xb8] sm:$0xff]
    %v379 = vld [vmem:[%s1 + $0xc0] sm:$0xff]
    %v380 = vld [vmem:[%s1 + $0xc8] sm:$0xff]
    %v381 = vld [vmem:[%s1 + $0xd0] sm:$0xff]
    %v382 = vld [vmem:[%s1 + $0xd8] sm:$0xff]
    %v383 = vld [vmem:[%s1 + $0xe0] sm:$0xff]
    %v384 = vld [vmem:[%s1 + $0xe8] sm:$0xff]
    %v385 = vld [vmem:[%s1 + $0xf0] sm:$0xff]
    %v386 = vld [vmem:[%s1 + $0xf8] sm:$0xff]
    %v419 = vunpack.c.l.b16 %v355
    %v420 = vunpack.c.h.b16 %v355
    %v421 = vunpack.c.l.b16 %v356
    %v422 = vunpack.c.h.b16 %v356
    %v423 = vunpack.c.l.b16 %v357
    %v424 = vunpack.c.h.b16 %v357
    %v425 = vunpack.c.l.b16 %v358
    %v426 = vunpack.c.h.b16 %v358
    %v427 = vunpack.c.l.b16 %v359
    %v428 = vunpack.c.h.b16 %v359
    %v429 = vunpack.c.l.b16 %v360
    %v430 = vunpack.c.h.b16 %v360
    %v431 = vunpack.c.l.b16 %v361
    %v432 = vunpack.c.h.b16 %v361
    %v433 = vunpack.c.l.b16 %v362
    %v434 = vunpack.c.h.b16 %v362
    %v435 = vunpack.c.l.b16 %v363
    %v436 = vunpack.c.h.b16 %v363
    %v437 = vunpack.c.l.b16 %v364
    %v438 = vunpack.c.h.b16 %v364
    %v439 = vunpack.c.l.b16 %v365
    %v440 = vunpack.c.h.b16 %v365
    %v441 = vunpack.c.l.b16 %v366
    %v442 = vunpack.c.h.b16 %v366
    %v443 = vunpack.c.l.b16 %v367
    %v444 = vunpack.c.h.b16 %v367
    %v445 = vunpack.c.l.b16 %v368
    %v446 = vunpack.c.h.b16 %v368
    %v447 = vunpack.c.l.b16 %v369
    %v448 = vunpack.c.h.b16 %v369
    %v449 = vunpack.c.l.b16 %v370
    %v450 = vunpack.c.h.b16 %v370
    %v451 = vunpack.c.l.b16 %v371
    %v452 = vunpack.c.h.b16 %v371
    %v453 = vunpack.c.l.b16 %v372
    %v454 = vunpack.c.h.b16 %v372
    %v455 = vunpack.c.l.b16 %v373
    %v456 = vunpack.c.h.b16 %v373
    %v457 = vunpack.c.l.b16 %v374
    %v458 = vunpack.c.h.b16 %v374
    %v459 = vunpack.c.l.b16 %v375
    %v460 = vunpack.c.h.b16 %v375
    %v461 = vunpack.c.l.b16 %v376
    %v462 = vunpack.c.h.b16 %v376
    %v463 = vunpack.c.l.b16 %v377
    %v464 = vunpack.c.h.b16 %v377
    %v465 = vunpack.c.l.b16 %v378
    %v466 = vunpack.c.h.b16 %v378
    %v467 = vunpack.c.l.b16 %v379
    %v468 = vunpack.c.h.b16 %v379
    %v469 = vunpack.c.l.b16 %v380
    %v470 = vunpack.c.h.b16 %v380
    %v471 = vunpack.c.l.b16 %v381
    %v472 = vunpack.c.h.b16 %v381
    %v473 = vunpack.c.l.b16 %v382
    %v474 = vunpack.c.h.b16 %v382
    %v475 = vunpack.c.l.b16 %v383
    %v476 = vunpack.c.h.b16 %v383
    %v477 = vunpack.c.l.b16 %v384
    %v478 = vunpack.c.h.b16 %v384
    %v479 = vunpack.c.l.b16 %v385
    %v480 = vunpack.c.h.b16 %v385
    %v481 = vunpack.c.l.b16 %v386
    %v482 = vunpack.c.h.b16 %v386
    %v483 = vpack.c.b16 %v423, %v419
    %v484 = vpack.c.b16 %v424, %v420
    %v485 = vpack.c.b16 %v425, %v421
    %v486 = vpack.c.b16 %v426, %v422
    %v487 = vpack.c.b16 %v431, %v427
    %v488 = vpack.c.b16 %v432, %v428
    %v489 = vpack.c.b16 %v433, %v429
    %v490 = vpack.c.b16 %v434, %v430
    %v491 = vpack.c.b16 %v439, %v435
    %v492 = vpack.c.b16 %v440, %v436
    %v493 = vpack.c.b16 %v441, %v437
    %v494 = vpack.c.b16 %v442, %v438
    %v495 = vpack.c.b16 %v447, %v443
    %v496 = vpack.c.b16 %v448, %v444
    %v497 = vpack.c.b16 %v449, %v445
    %v498 = vpack.c.b16 %v450, %v446
    %v499 = vpack.c.b16 %v455, %v451
    %v500 = vpack.c.b16 %v456, %v452
    %v501 = vpack.c.b16 %v457, %v453
    %v502 = vpack.c.b16 %v458, %v454
    %v503 = vpack.c.b16 %v463, %v459
    %v504 = vpack.c.b16 %v464, %v460
    %v505 = vpack.c.b16 %v465, %v461
    %v506 = vpack.c.b16 %v466, %v462
    %v507 = vpack.c.b16 %v471, %v467
    %v508 = vpack.c.b16 %v472, %v468
    %v509 = vpack.c.b16 %v473, %v469
    %v510 = vpack.c.b16 %v474, %v470
    %v511 = vpack.c.b16 %v479, %v475
    %v512 = vpack.c.b16 %v480, %v476
    %v513 = vpack.c.b16 %v481, %v477
    %v514 = vpack.c.b16 %v482, %v478
    %547 = vmatprep.subr.bf16.mxu0 %v484
    %548 = vmatpush1.bf16.msra.mxu0 %v483
    %549 = vmatprep.subr.bf16.mxu0 %v488
    %550 = vmatpush1.bf16.msra.mxu0 %v487
    %551 = vmatprep.subr.bf16.mxu0 %v492
    %552 = vmatpush1.bf16.msra.mxu0 %v491
    %553 = vmatprep.subr.bf16.mxu0 %v496
    %554 = vmatpush1.bf16.msra.mxu0 %v495
    %555 = vmatprep.subr.bf16.mxu0 %v500
    %556 = vmatpush1.bf16.msra.mxu0 %v499
    %557 = vmatprep.subr.bf16.mxu0 %v504
    %558 = vmatpush1.bf16.msra.mxu0 %v503
    %559 = vmatprep.subr.bf16.mxu0 %v508
    %560 = vmatpush1.bf16.msra.mxu0 %v507
    %561 = vmatprep.subr.bf16.mxu0 %v512
    %562 = vmatpush1.bf16.msra.mxu0 %v511
    %563 = vmatprep.subr.bf16.mxu0 0
    %564 = vmatpush1.bf16.msra.mxu0 0
    %565 = vmatprep.subr.bf16.mxu0 0
    %566 = vmatpush1.bf16.msra.mxu0 0
    %567 = vmatprep.subr.bf16.mxu0 0
    %568 = vmatpush1.bf16.msra.mxu0 0
    %569 = vmatprep.subr.bf16.mxu0 0
    %570 = vmatpush1.bf16.msra.mxu0 0
    %571 = vmatprep.subr.bf16.mxu0 0
    %572 = vmatpush1.bf16.msra.mxu0 0
    %573 = vmatprep.subr.bf16.mxu0 0
    %574 = vmatpush1.bf16.msra.mxu0 0
    %575 = vmatprep.subr.bf16.mxu0 0
    %576 = vmatpush1.bf16.msra.mxu0 0
    %577 = vmatprep.subr.bf16.mxu0 0
    %578 = vmatpush1.bf16.msra.mxu0 0
    %579 = vmatprep.mubr.bf16.mxu0 0
    %580 = vmatmul.mubr.bf16.gmra.mrb[0].mxu0 %v354
    %v581 = vpop.f32.mrb[0].mxu0
    %v582 = vadd.f32 0.0, %v581
    %v583 = vpop.f32.mrb[0].mxu0
    %v584 = vadd.f32 0.0, %v583
    %v585 = vpop.f32.mrb[0].mxu0
    %v586 = vpop.f32.mrb[0].mxu0
    %587 = vdwg.mxu0
    %588 = vmatprep.subr.bf16.mxu0 %v486
    %589 = vmatpush1.bf16.msra.mxu0 %v485
    %590 = vmatprep.subr.bf16.mxu0 %v490
    %591 = vmatpush1.bf16.msra.mxu0 %v489
    %592 = vmatprep.subr.bf16.mxu0 %v494
    %593 = vmatpush1.bf16.msra.mxu0 %v493
    %594 = vmatprep.subr.bf16.mxu0 %v498
    %595 = vmatpush1.bf16.msra.mxu0 %v497
    %596 = vmatprep.subr.bf16.mxu0 %v502
    %597 = vmatpush1.bf16.msra.mxu0 %v501
    %598 = vmatprep.subr.bf16.mxu0 %v506
    %599 = vmatpush1.bf16.msra.mxu0 %v505
    %600 = vmatprep.subr.bf16.mxu0 %v510
    %601 = vmatpush1.bf16.msra.mxu0 %v509
    %602 = vmatprep.subr.bf16.mxu0 %v514
    %603 = vmatpush1.bf16.msra.mxu0 %v513
    %604 = vmatprep.subr.bf16.mxu0 0
    %605 = vmatpush1.bf16.msra.mxu0 0
    %606 = vmatprep.subr.bf16.mxu0 0
    %607 = vmatpush1.bf16.msra.mxu0 0
    %608 = vmatprep.subr.bf16.mxu0 0
    %609 = vmatpush1.bf16.msra.mxu0 0
    %610 = vmatprep.subr.bf16.mxu0 0
    %611 = vmatpush1.bf16.msra.mxu0 0
    %612 = vmatprep.subr.bf16.mxu0 0
    %613 = vmatpush1.bf16.msra.mxu0 0
    %614 = vmatprep.subr.bf16.mxu0 0
    %615 = vmatpush1.bf16.msra.mxu0 0
    %616 = vmatprep.subr.bf16.mxu0 0
    %617 = vmatpush1.bf16.msra.mxu0 0
    %618 = vmatprep.subr.bf16.mxu0 0
    %619 = vmatpush1.bf16.msra.mxu0 0
    %620 = vmatprep.mubr.bf16.mxu0 0
    %621 = vmatmul.mubr.bf16.gmra.mrb[0].mxu0 %v354
    %v622 = vpop.f32.mrb[0].mxu0
    %v623 = vadd.f32 0.0, %v622
    %v624 = vpop.f32.mrb[0].mxu0
    %v625 = vadd.f32 0.0, %v624
    %v626 = vpop.f32.mrb[0].mxu0
    %v627 = vpop.f32.mrb[0].mxu0
    %628 = vdwg.mxu0
    %v633 = vcombine.low %v582, %v584
    %v634 = vcombine.low %v623, %v625
    %v636 = vunpack.c.l.s4 1983009808
    %v637 = vunpack.c.0.s8 %v636
    %v638 = vlaneseq
    %v639 = vshrl.u32 %v638, 7
    %v640 = vsub.s32 %v637, %v639
    %v641 = vrot.slane %v633, %v640
    %v643 = vunpack.c.l.s4 1983009808
    %v644 = vunpack.c.0.s8 %v643
    %v645 = vlaneseq
    %v646 = vshrl.u32 %v645, 7
    %v647 = vsub.s32 %v644, %v646
    %v648 = vrot.slane %v634, %v647
    %v649 = vcombine.low %v641, %v648
    %v651 = vadd.f32 %v353, %v649
    %v652 = vmul.f32 %v651, 0.5
    %v653 = vtanh.pop %v652
    %v654 = vadd.f32 %v653, 1.0
    %v655 = vmul.f32 %v654, 0.5
    %v657 = vrot.slane %v651, 2
    %v659 = vmul.f32 %v657, 0.5
    %v660 = vtanh.pop %v659
    %v661 = vadd.f32 %v660, 1.0
    %v662 = vmul.f32 %v661, 0.5
    %v663 = vrot.slane %v651, 4
    %v665 = vtanh.pop %v663
    %v666 = vrot.slane %v651, 6
    %v668 = vmul.f32 %v666, 0.5
    %v669 = vtanh.pop %v668
    %v670 = vadd.f32 %v669, 1.0
    %v671 = vmul.f32 %v670, 0.5
    %v672 = vmul.f32 %v662, %v347
    %v673 = vmul.f32 %v655, %v665
    %v674 = vadd.f32 %v672, %v673
    %v675 = vtanh.pop %v674
    %v676 = vmul.f32 %v671, %v675
    %s677 = scalar_lea.vmem %s2, 2
    %678 = vst [vmem:[%s677] sm:$0x3] %v676
    %s679 = scalar_lea.vmem %s0, 8
    %v680 = vld [vmem:[%s679] sm:$0xf]
    %v681 = vunpack.c.l.bf16 %v680
    %v682 = vpack.c.bf16 %v676, %v676
    %v683 = vld [vmem:[%s1] sm:$0xff]
    %v684 = vld [vmem:[%s1 + $0x8] sm:$0xff]
    %v685 = vld [vmem:[%s1 + $0x10] sm:$0xff]
    %v686 = vld [vmem:[%s1 + $0x18] sm:$0xff]
    %v687 = vld [vmem:[%s1 + $0x20] sm:$0xff]
    %v688 = vld [vmem:[%s1 + $0x28] sm:$0xff]
    %v689 = vld [vmem:[%s1 + $0x30] sm:$0xff]
    %v690 = vld [vmem:[%s1 + $0x38] sm:$0xff]
    %v691 = vld [vmem:[%s1 + $0x40] sm:$0xff]
    %v692 = vld [vmem:[%s1 + $0x48] sm:$0xff]
    %v693 = vld [vmem:[%s1 + $0x50] sm:$0xff]
    %v694 = vld [vmem:[%s1 + $0x58] sm:$0xff]
    %v695 = vld [vmem:[%s1 + $0x60] sm:$0xff]
    %v696 = vld [vmem:[%s1 + $0x68] sm:$0xff]
    %v697 = vld [vmem:[%s1 + $0x70] sm:$0xff]
    %v698 = vld [vmem:[%s1 + $0x78] sm:$0xff]
    %v699 = vld [vmem:[%s1 + $0x80] sm:$0xff]
    %v700 = vld [vmem:[%s1 + $0x88] sm:$0xff]
    %v701 = vld [vmem:[%s1 + $0x90] sm:$0xff]
    %v702 = vld [vmem:[%s1 + $0x98] sm:$0xff]
    %v703 = vld [vmem:[%s1 + $0xa0] sm:$0xff]
    %v704 = vld [vmem:[%s1 + $0xa8] sm:$0xff]
    %v705 = vld [vmem:[%s1 + $0xb0] sm:$0xff]
    %v706 = vld [vmem:[%s1 + $0xb8] sm:$0xff]
    %v707 = vld [vmem:[%s1 + $0xc0] sm:$0xff]
    %v708 = vld [vmem:[%s1 + $0xc8] sm:$0xff]
    %v709 = vld [vmem:[%s1 + $0xd0] sm:$0xff]
    %v710 = vld [vmem:[%s1 + $0xd8] sm:$0xff]
    %v711 = vld [vmem:[%s1 + $0xe0] sm:$0xff]
    %v712 = vld [vmem:[%s1 + $0xe8] sm:$0xff]
    %v713 = vld [vmem:[%s1 + $0xf0] sm:$0xff]
    %v714 = vld [vmem:[%s1 + $0xf8] sm:$0xff]
    %v747 = vunpack.c.l.b16 %v683
    %v748 = vunpack.c.h.b16 %v683
    %v749 = vunpack.c.l.b16 %v684
    %v750 = vunpack.c.h.b16 %v684
    %v751 = vunpack.c.l.b16 %v685
    %v752 = vunpack.c.h.b16 %v685
    %v753 = vunpack.c.l.b16 %v686
    %v754 = vunpack.c.h.b16 %v686
    %v755 = vunpack.c.l.b16 %v687
    %v756 = vunpack.c.h.b16 %v687
    %v757 = vunpack.c.l.b16 %v688
    %v758 = vunpack.c.h.b16 %v688
    %v759 = vunpack.c.l.b16 %v689
    %v760 = vunpack.c.h.b16 %v689
    %v761 = vunpack.c.l.b16 %v690
    %v762 = vunpack.c.h.b16 %v690
    %v763 = vunpack.c.l.b16 %v691
    %v764 = vunpack.c.h.b16 %v691
    %v765 = vunpack.c.l.b16 %v692
    %v766 = vunpack.c.h.b16 %v692
    %v767 = vunpack.c.l.b16 %v693
    %v768 = vunpack.c.h.b16 %v693
    %v769 = vunpack.c.l.b16 %v694
    %v770 = vunpack.c.h.b16 %v694
    %v771 = vunpack.c.l.b16 %v695
    %v772 = vunpack.c.h.b16 %v695
    %v773 = vunpack.c.l.b16 %v696
    %v774 = vunpack.c.h.b16 %v696
    %v775 = vunpack.c.l.b16 %v697
    %v776 = vunpack.c.h.b16 %v697
    %v777 = vunpack.c.l.b16 %v698
    %v778 = vunpack.c.h.b16 %v698
    %v779 = vunpack.c.l.b16 %v699
    %v780 = vunpack.c.h.b16 %v699
    %v781 = vunpack.c.l.b16 %v700
    %v782 = vunpack.c.h.b16 %v700
    %v783 = vunpack.c.l.b16 %v701
    %v784 = vunpack.c.h.b16 %v701
    %v785 = vunpack.c.l.b16 %v702
    %v786 = vunpack.c.h.b16 %v702
    %v787 = vunpack.c.l.b16 %v703
    %v788 = vunpack.c.h.b16 %v703
    %v789 = vunpack.c.l.b16 %v704
    %v790 = vunpack.c.h.b16 %v704
    %v791 = vunpack.c.l.b16 %v705
    %v792 = vunpack.c.h.b16 %v705
    %v793 = vunpack.c.l.b16 %v706
    %v794 = vunpack.c.h.b16 %v706
    %v795 = vunpack.c.l.b16 %v707
    %v796 = vunpack.c.h.b16 %v707
    %v797 = vunpack.c.l.b16 %v708
    %v798 = vunpack.c.h.b16 %v708
    %v799 = vunpack.c.l.b16 %v709
    %v800 = vunpack.c.h.b16 %v709
    %v801 = vunpack.c.l.b16 %v710
    %v802 = vunpack.c.h.b16 %v710
    %v803 = vunpack.c.l.b16 %v711
    %v804 = vunpack.c.h.b16 %v711
    %v805 = vunpack.c.l.b16 %v712
    %v806 = vunpack.c.h.b16 %v712
    %v807 = vunpack.c.l.b16 %v713
    %v808 = vunpack.c.h.b16 %v713
    %v809 = vunpack.c.l.b16 %v714
    %v810 = vunpack.c.h.b16 %v714
    %v811 = vpack.c.b16 %v751, %v747
    %v812 = vpack.c.b16 %v752, %v748
    %v813 = vpack.c.b16 %v753, %v749
    %v814 = vpack.c.b16 %v754, %v750
    %v815 = vpack.c.b16 %v759, %v755
    %v816 = vpack.c.b16 %v760, %v756
    %v817 = vpack.c.b16 %v761, %v757
    %v818 = vpack.c.b16 %v762, %v758
    %v819 = vpack.c.b16 %v767, %v763
    %v820 = vpack.c.b16 %v768, %v764
    %v821 = vpack.c.b16 %v769, %v765
    %v822 = vpack.c.b16 %v770, %v766
    %v823 = vpack.c.b16 %v775, %v771
    %v824 = vpack.c.b16 %v776, %v772
    %v825 = vpack.c.b16 %v777, %v773
    %v826 = vpack.c.b16 %v778, %v774
    %v827 = vpack.c.b16 %v783, %v779
    %v828 = vpack.c.b16 %v784, %v780
    %v829 = vpack.c.b16 %v785, %v781
    %v830 = vpack.c.b16 %v786, %v782
    %v831 = vpack.c.b16 %v791, %v787
    %v832 = vpack.c.b16 %v792, %v788
    %v833 = vpack.c.b16 %v793, %v789
    %v834 = vpack.c.b16 %v794, %v790
    %v835 = vpack.c.b16 %v799, %v795
    %v836 = vpack.c.b16 %v800, %v796
    %v837 = vpack.c.b16 %v801, %v797
    %v838 = vpack.c.b16 %v802, %v798
    %v839 = vpack.c.b16 %v807, %v803
    %v840 = vpack.c.b16 %v808, %v804
    %v841 = vpack.c.b16 %v809, %v805
    %v842 = vpack.c.b16 %v810, %v806
    %875 = vmatprep.subr.bf16.mxu0 %v812
    %876 = vmatpush1.bf16.msra.mxu0 %v811
    %877 = vmatprep.subr.bf16.mxu0 %v816
    %878 = vmatpush1.bf16.msra.mxu0 %v815
    %879 = vmatprep.subr.bf16.mxu0 %v820
    %880 = vmatpush1.bf16.msra.mxu0 %v819
    %881 = vmatprep.subr.bf16.mxu0 %v824
    %882 = vmatpush1.bf16.msra.mxu0 %v823
    %883 = vmatprep.subr.bf16.mxu0 %v828
    %884 = vmatpush1.bf16.msra.mxu0 %v827
    %885 = vmatprep.subr.bf16.mxu0 %v832
    %886 = vmatpush1.bf16.msra.mxu0 %v831
    %887 = vmatprep.subr.bf16.mxu0 %v836
    %888 = vmatpush1.bf16.msra.mxu0 %v835
    %889 = vmatprep.subr.bf16.mxu0 %v840
    %890 = vmatpush1.bf16.msra.mxu0 %v839
    %891 = vmatprep.subr.bf16.mxu0 0
    %892 = vmatpush1.bf16.msra.mxu0 0
    %893 = vmatprep.subr.bf16.mxu0 0
    %894 = vmatpush1.bf16.msra.mxu0 0
    %895 = vmatprep.subr.bf16.mxu0 0
    %896 = vmatpush1.bf16.msra.mxu0 0
    %897 = vmatprep.subr.bf16.mxu0 0
    %898 = vmatpush1.bf16.msra.mxu0 0
    %899 = vmatprep.subr.bf16.mxu0 0
    %900 = vmatpush1.bf16.msra.mxu0 0
    %901 = vmatprep.subr.bf16.mxu0 0
    %902 = vmatpush1.bf16.msra.mxu0 0
    %903 = vmatprep.subr.bf16.mxu0 0
    %904 = vmatpush1.bf16.msra.mxu0 0
    %905 = vmatprep.subr.bf16.mxu0 0
    %906 = vmatpush1.bf16.msra.mxu0 0
    %907 = vmatprep.mubr.bf16.mxu0 0
    %908 = vmatmul.mubr.bf16.gmra.mrb[0].mxu0 %v682
    %v909 = vpop.f32.mrb[0].mxu0
    %v910 = vadd.f32 0.0, %v909
    %v911 = vpop.f32.mrb[0].mxu0
    %v912 = vadd.f32 0.0, %v911
    %v913 = vpop.f32.mrb[0].mxu0
    %v914 = vpop.f32.mrb[0].mxu0
    %915 = vdwg.mxu0
    %916 = vmatprep.subr.bf16.mxu0 %v814
    %917 = vmatpush1.bf16.msra.mxu0 %v813
    %918 = vmatprep.subr.bf16.mxu0 %v818
    %919 = vmatpush1.bf16.msra.mxu0 %v817
    %920 = vmatprep.subr.bf16.mxu0 %v822
    %921 = vmatpush1.bf16.msra.mxu0 %v821
    %922 = vmatprep.subr.bf16.mxu0 %v826
    %923 = vmatpush1.bf16.msra.mxu0 %v825
    %924 = vmatprep.subr.bf16.mxu0 %v830
    %925 = vmatpush1.bf16.msra.mxu0 %v829
    %926 = vmatprep.subr.bf16.mxu0 %v834
    %927 = vmatpush1.bf16.msra.mxu0 %v833
    %928 = vmatprep.subr.bf16.mxu0 %v838
    %929 = vmatpush1.bf16.msra.mxu0 %v837
    %930 = vmatprep.subr.bf16.mxu0 %v842
    %931 = vmatpush1.bf16.msra.mxu0 %v841
    %932 = vmatprep.subr.bf16.mxu0 0
    %933 = vmatpush1.bf16.msra.mxu0 0
    %934 = vmatprep.subr.bf16.mxu0 0
    %935 = vmatpush1.bf16.msra.mxu0 0
    %936 = vmatprep.subr.bf16.mxu0 0
    %937 = vmatpush1.bf16.msra.mxu0 0
    %938 = vmatprep.subr.bf16.mxu0 0
    %939 = vmatpush1.bf16.msra.mxu0 0
    %940 = vmatprep.subr.bf16.mxu0 0
    %941 = vmatpush1.bf16.msra.mxu0 0
    %942 = vmatprep.subr.bf16.mxu0 0
    %943 = vmatpush1.bf16.msra.mxu0 0
    %944 = vmatprep.subr.bf16.mxu0 0
    %945 = vmatpush1.bf16.msra.mxu0 0
    %946 = vmatprep.subr.bf16.mxu0 0
    %947 = vmatpush1.bf16.msra.mxu0 0
    %948 = vmatprep.mubr.bf16.mxu0 0
    %949 = vmatmul.mubr.bf16.gmra.mrb[0].mxu0 %v682
    %v950 = vpop.f32.mrb[0].mxu0
    %v951 = vadd.f32 0.0, %v950
    %v952 = vpop.f32.mrb[0].mxu0
    %v953 = vadd.f32 0.0, %v952
    %v954 = vpop.f32.mrb[0].mxu0
    %v955 = vpop.f32.mrb[0].mxu0
    %956 = vdwg.mxu0
    %v961 = vcombine.low %v910, %v912
    %v962 = vcombine.low %v951, %v953
    %v964 = vunpack.c.l.s4 1983009808
    %v965 = vunpack.c.0.s8 %v964
    %v966 = vlaneseq
    %v967 = vshrl.u32 %v966, 7
    %v968 = vsub.s32 %v965, %v967
    %v969 = vrot.slane %v961, %v968
    %v971 = vunpack.c.l.s4 1983009808
    %v972 = vunpack.c.0.s8 %v971
    %v973 = vlaneseq
    %v974 = vshrl.u32 %v973, 7
    %v975 = vsub.s32 %v972, %v974
    %v976 = vrot.slane %v962, %v975
    %v977 = vcombine.low %v969, %v976
    %v979 = vadd.f32 %v681, %v977
    %v980 = vmul.f32 %v979, 0.5
    %v981 = vtanh.pop %v980
    %v982 = vadd.f32 %v981, 1.0
    %v983 = vmul.f32 %v982, 0.5
    %v985 = vrot.slane %v979, 2
    %v987 = vmul.f32 %v985, 0.5
    %v988 = vtanh.pop %v987
    %v989 = vadd.f32 %v988, 1.0
    %v990 = vmul.f32 %v989, 0.5
    %v991 = vrot.slane %v979, 4
    %v993 = vtanh.pop %v991
    %v994 = vrot.slane %v979, 6
    %v996 = vmul.f32 %v994, 0.5
    %v997 = vtanh.pop %v996
    %v998 = vadd.f32 %v997, 1.0
    %v999 = vmul.f32 %v998, 0.5
    %v1000 = vmul.f32 %v990, %v674
    %v1001 = vmul.f32 %v983, %v993
    %v1002 = vadd.f32 %v1000, %v1001
    %v1003 = vtanh.pop %v1002
    %v1004 = vmul.f32 %v999, %v1003
    %s1005 = scalar_lea.vmem %s2, 4
    %1006 = vst [vmem:[%s1005] sm:$0x3] %v1004
    %s1007 = scalar_lea.vmem %s0, 12
    %v1008 = vld [vmem:[%s1007] sm:$0xf]
    %v1009 = vunpack.c.l.bf16 %v1008
    %v1010 = vpack.c.bf16 %v1004, %v1004
    %v1011 = vld [vmem:[%s1] sm:$0xff]
    %v1012 = vld [vmem:[%s1 + $0x8] sm:$0xff]
    %v1013 = vld [vmem:[%s1 + $0x10] sm:$0xff]
    %v1014 = vld [vmem:[%s1 + $0x18] sm:$0xff]
    %v1015 = vld [vmem:[%s1 + $0x20] sm:$0xff]
    %v1016 = vld [vmem:[%s1 + $0x28] sm:$0xff]
    %v1017 = vld [vmem:[%s1 + $0x30] sm:$0xff]
    %v1018 = vld [vmem:[%s1 + $0x38] sm:$0xff]
    %v1019 = vld [vmem:[%s1 + $0x40] sm:$0xff]
    %v1020 = vld [vmem:[%s1 + $0x48] sm:$0xff]
    %v1021 = vld [vmem:[%s1 + $0x50] sm:$0xff]
    %v1022 = vld [vmem:[%s1 + $0x58] sm:$0xff]
    %v1023 = vld [vmem:[%s1 + $0x60] sm:$0xff]
    %v1024 = vld [vmem:[%s1 + $0x68] sm:$0xff]
    %v1025 = vld [vmem:[%s1 + $0x70] sm:$0xff]
    %v1026 = vld [vmem:[%s1 + $0x78] sm:$0xff]
    %v1027 = vld [vmem:[%s1 + $0x80] sm:$0xff]
    %v1028 = vld [vmem:[%s1 + $0x88] sm:$0xff]
    %v1029 = vld [vmem:[%s1 + $0x90] sm:$0xff]
    %v1030 = vld [vmem:[%s1 + $0x98] sm:$0xff]
    %v1031 = vld [vmem:[%s1 + $0xa0] sm:$0xff]
    %v1032 = vld [vmem:[%s1 + $0xa8] sm:$0xff]
    %v1033 = vld [vmem:[%s1 + $0xb0] sm:$0xff]
    %v1034 = vld [vmem:[%s1 + $0xb8] sm:$0xff]
    %v1035 = vld [vmem:[%s1 + $0xc0] sm:$0xff]
    %v1036 = vld [vmem:[%s1 + $0xc8] sm:$0xff]
    %v1037 = vld [vmem:[%s1 + $0xd0] sm:$0xff]
    %v1038 = vld [vmem:[%s1 + $0xd8] sm:$0xff]
    %v1039 = vld [vmem:[%s1 + $0xe0] sm:$0xff]
    %v1040 = vld [vmem:[%s1 + $0xe8] sm:$0xff]
    %v1041 = vld [vmem:[%s1 + $0xf0] sm:$0xff]
    %v1042 = vld [vmem:[%s1 + $0xf8] sm:$0xff]
    %v1075 = vunpack.c.l.b16 %v1011
    %v1076 = vunpack.c.h.b16 %v1011
    %v1077 = vunpack.c.l.b16 %v1012
    %v1078 = vunpack.c.h.b16 %v1012
    %v1079 = vunpack.c.l.b16 %v1013
    %v1080 = vunpack.c.h.b16 %v1013
    %v1081 = vunpack.c.l.b16 %v1014
    %v1082 = vunpack.c.h.b16 %v1014
    %v1083 = vunpack.c.l.b16 %v1015
    %v1084 = vunpack.c.h.b16 %v1015
    %v1085 = vunpack.c.l.b16 %v1016
    %v1086 = vunpack.c.h.b16 %v1016
    %v1087 = vunpack.c.l.b16 %v1017
    %v1088 = vunpack.c.h.b16 %v1017
    %v1089 = vunpack.c.l.b16 %v1018
    %v1090 = vunpack.c.h.b16 %v1018
    %v1091 = vunpack.c.l.b16 %v1019
    %v1092 = vunpack.c.h.b16 %v1019
    %v1093 = vunpack.c.l.b16 %v1020
    %v1094 = vunpack.c.h.b16 %v1020
    %v1095 = vunpack.c.l.b16 %v1021
    %v1096 = vunpack.c.h.b16 %v1021
    %v1097 = vunpack.c.l.b16 %v1022
    %v1098 = vunpack.c.h.b16 %v1022
    %v1099 = vunpack.c.l.b16 %v1023
    %v1100 = vunpack.c.h.b16 %v1023
    %v1101 = vunpack.c.l.b16 %v1024
    %v1102 = vunpack.c.h.b16 %v1024
    %v1103 = vunpack.c.l.b16 %v1025
    %v1104 = vunpack.c.h.b16 %v1025
    %v1105 = vunpack.c.l.b16 %v1026
    %v1106 = vunpack.c.h.b16 %v1026
    %v1107 = vunpack.c.l.b16 %v1027
    %v1108 = vunpack.c.h.b16 %v1027
    %v1109 = vunpack.c.l.b16 %v1028
    %v1110 = vunpack.c.h.b16 %v1028
    %v1111 = vunpack.c.l.b16 %v1029
    %v1112 = vunpack.c.h.b16 %v1029
    %v1113 = vunpack.c.l.b16 %v1030
    %v1114 = vunpack.c.h.b16 %v1030
    %v1115 = vunpack.c.l.b16 %v1031
    %v1116 = vunpack.c.h.b16 %v1031
    %v1117 = vunpack.c.l.b16 %v1032
    %v1118 = vunpack.c.h.b16 %v1032
    %v1119 = vunpack.c.l.b16 %v1033
    %v1120 = vunpack.c.h.b16 %v1033
    %v1121 = vunpack.c.l.b16 %v1034
    %v1122 = vunpack.c.h.b16 %v1034
    %v1123 = vunpack.c.l.b16 %v1035
    %v1124 = vunpack.c.h.b16 %v1035
    %v1125 = vunpack.c.l.b16 %v1036
    %v1126 = vunpack.c.h.b16 %v1036
    %v1127 = vunpack.c.l.b16 %v1037
    %v1128 = vunpack.c.h.b16 %v1037
    %v1129 = vunpack.c.l.b16 %v1038
    %v1130 = vunpack.c.h.b16 %v1038
    %v1131 = vunpack.c.l.b16 %v1039
    %v1132 = vunpack.c.h.b16 %v1039
    %v1133 = vunpack.c.l.b16 %v1040
    %v1134 = vunpack.c.h.b16 %v1040
    %v1135 = vunpack.c.l.b16 %v1041
    %v1136 = vunpack.c.h.b16 %v1041
    %v1137 = vunpack.c.l.b16 %v1042
    %v1138 = vunpack.c.h.b16 %v1042
    %v1139 = vpack.c.b16 %v1079, %v1075
    %v1140 = vpack.c.b16 %v1080, %v1076
    %v1141 = vpack.c.b16 %v1081, %v1077
    %v1142 = vpack.c.b16 %v1082, %v1078
    %v1143 = vpack.c.b16 %v1087, %v1083
    %v1144 = vpack.c.b16 %v1088, %v1084
    %v1145 = vpack.c.b16 %v1089, %v1085
    %v1146 = vpack.c.b16 %v1090, %v1086
    %v1147 = vpack.c.b16 %v1095, %v1091
    %v1148 = vpack.c.b16 %v1096, %v1092
    %v1149 = vpack.c.b16 %v1097, %v1093
    %v1150 = vpack.c.b16 %v1098, %v1094
    %v1151 = vpack.c.b16 %v1103, %v1099
    %v1152 = vpack.c.b16 %v1104, %v1100
    %v1153 = vpack.c.b16 %v1105, %v1101
    %v1154 = vpack.c.b16 %v1106, %v1102
    %v1155 = vpack.c.b16 %v1111, %v1107
    %v1156 = vpack.c.b16 %v1112, %v1108
    %v1157 = vpack.c.b16 %v1113, %v1109
    %v1158 = vpack.c.b16 %v1114, %v1110
    %v1159 = vpack.c.b16 %v1119, %v1115
    %v1160 = vpack.c.b16 %v1120, %v1116
    %v1161 = vpack.c.b16 %v1121, %v1117
    %v1162 = vpack.c.b16 %v1122, %v1118
    %v1163 = vpack.c.b16 %v1127, %v1123
    %v1164 = vpack.c.b16 %v1128, %v1124
    %v1165 = vpack.c.b16 %v1129, %v1125
    %v1166 = vpack.c.b16 %v1130, %v1126
    %v1167 = vpack.c.b16 %v1135, %v1131
    %v1168 = vpack.c.b16 %v1136, %v1132
    %v1169 = vpack.c.b16 %v1137, %v1133
    %v1170 = vpack.c.b16 %v1138, %v1134
    %1203 = vmatprep.subr.bf16.mxu0 %v1140
    %1204 = vmatpush1.bf16.msra.mxu0 %v1139
    %1205 = vmatprep.subr.bf16.mxu0 %v1144
    %1206 = vmatpush1.bf16.msra.mxu0 %v1143
    %1207 = vmatprep.subr.bf16.mxu0 %v1148
    %1208 = vmatpush1.bf16.msra.mxu0 %v1147
    %1209 = vmatprep.subr.bf16.mxu0 %v1152
    %1210 = vmatpush1.bf16.msra.mxu0 %v1151
    %1211 = vmatprep.subr.bf16.mxu0 %v1156
    %1212 = vmatpush1.bf16.msra.mxu0 %v1155
    %1213 = vmatprep.subr.bf16.mxu0 %v1160
    %1214 = vmatpush1.bf16.msra.mxu0 %v1159
    %1215 = vmatprep.subr.bf16.mxu0 %v1164
    %1216 = vmatpush1.bf16.msra.mxu0 %v1163
    %1217 = vmatprep.subr.bf16.mxu0 %v1168
    %1218 = vmatpush1.bf16.msra.mxu0 %v1167
    %1219 = vmatprep.subr.bf16.mxu0 0
    %1220 = vmatpush1.bf16.msra.mxu0 0
    %1221 = vmatprep.subr.bf16.mxu0 0
    %1222 = vmatpush1.bf16.msra.mxu0 0
    %1223 = vmatprep.subr.bf16.mxu0 0
    %1224 = vmatpush1.bf16.msra.mxu0 0
    %1225 = vmatprep.subr.bf16.mxu0 0
    %1226 = vmatpush1.bf16.msra.mxu0 0
    %1227 = vmatprep.subr.bf16.mxu0 0
    %1228 = vmatpush1.bf16.msra.mxu0 0
    %1229 = vmatprep.subr.bf16.mxu0 0
    %1230 = vmatpush1.bf16.msra.mxu0 0
    %1231 = vmatprep.subr.bf16.mxu0 0
    %1232 = vmatpush1.bf16.msra.mxu0 0
    %1233 = vmatprep.subr.bf16.mxu0 0
    %1234 = vmatpush1.bf16.msra.mxu0 0
    %1235 = vmatprep.mubr.bf16.mxu0 0
    %1236 = vmatmul.mubr.bf16.gmra.mrb[0].mxu0 %v1010
    %v1237 = vpop.f32.mrb[0].mxu0
    %v1238 = vadd.f32 0.0, %v1237
    %v1239 = vpop.f32.mrb[0].mxu0
    %v1240 = vadd.f32 0.0, %v1239
    %v1241 = vpop.f32.mrb[0].mxu0
    %v1242 = vpop.f32.mrb[0].mxu0
    %1243 = vdwg.mxu0
    %1244 = vmatprep.subr.bf16.mxu0 %v1142
    %1245 = vmatpush1.bf16.msra.mxu0 %v1141
    %1246 = vmatprep.subr.bf16.mxu0 %v1146
    %1247 = vmatpush1.bf16.msra.mxu0 %v1145
    %1248 = vmatprep.subr.bf16.mxu0 %v1150
    %1249 = vmatpush1.bf16.msra.mxu0 %v1149
    %1250 = vmatprep.subr.bf16.mxu0 %v1154
    %1251 = vmatpush1.bf16.msra.mxu0 %v1153
    %1252 = vmatprep.subr.bf16.mxu0 %v1158
    %1253 = vmatpush1.bf16.msra.mxu0 %v1157
    %1254 = vmatprep.subr.bf16.mxu0 %v1162
    %1255 = vmatpush1.bf16.msra.mxu0 %v1161
    %1256 = vmatprep.subr.bf16.mxu0 %v1166
    %1257 = vmatpush1.bf16.msra.mxu0 %v1165
    %1258 = vmatprep.subr.bf16.mxu0 %v1170
    %1259 = vmatpush1.bf16.msra.mxu0 %v1169
    %1260 = vmatprep.subr.bf16.mxu0 0
    %1261 = vmatpush1.bf16.msra.mxu0 0
    %1262 = vmatprep.subr.bf16.mxu0 0
    %1263 = vmatpush1.bf16.msra.mxu0 0
    %1264 = vmatprep.subr.bf16.mxu0 0
    %1265 = vmatpush1.bf16.msra.mxu0 0
    %1266 = vmatprep.subr.bf16.mxu0 0
    %1267 = vmatpush1.bf16.msra.mxu0 0
    %1268 = vmatprep.subr.bf16.mxu0 0
    %1269 = vmatpush1.bf16.msra.mxu0 0
    %1270 = vmatprep.subr.bf16.mxu0 0
    %1271 = vmatpush1.bf16.msra.mxu0 0
    %1272 = vmatprep.subr.bf16.mxu0 0
    %1273 = vmatpush1.bf16.msra.mxu0 0
    %1274 = vmatprep.subr.bf16.mxu0 0
    %1275 = vmatpush1.bf16.msra.mxu0 0
    %1276 = vmatprep.mubr.bf16.mxu0 0
    %1277 = vmatmul.mubr.bf16.gmra.mrb[0].mxu0 %v1010
    %v1278 = vpop.f32.mrb[0].mxu0
    %v1279 = vadd.f32 0.0, %v1278
    %v1280 = vpop.f32.mrb[0].mxu0
    %v1281 = vadd.f32 0.0, %v1280
    %v1282 = vpop.f32.mrb[0].mxu0
    %v1283 = vpop.f32.mrb[0].mxu0
    %1284 = vdwg.mxu0
    %v1289 = vcombine.low %v1238, %v1240
    %v1290 = vcombine.low %v1279, %v1281
    %v1292 = vunpack.c.l.s4 1983009808
    %v1293 = vunpack.c.0.s8 %v1292
    %v1294 = vlaneseq
    %v1295 = vshrl.u32 %v1294, 7
    %v1296 = vsub.s32 %v1293, %v1295
    %v1297 = vrot.slane %v1289, %v1296
    %v1299 = vunpack.c.l.s4 1983009808
    %v1300 = vunpack.c.0.s8 %v1299
    %v1301 = vlaneseq
    %v1302 = vshrl.u32 %v1301, 7
    %v1303 = vsub.s32 %v1300, %v1302
    %v1304 = vrot.slane %v1290, %v1303
    %v1305 = vcombine.low %v1297, %v1304
    %v1307 = vadd.f32 %v1009, %v1305
    %v1308 = vmul.f32 %v1307, 0.5
    %v1309 = vtanh.pop %v1308
    %v1310 = vadd.f32 %v1309, 1.0
    %v1311 = vmul.f32 %v1310, 0.5
    %v1313 = vrot.slane %v1307, 2
    %v1315 = vmul.f32 %v1313, 0.5
    %v1316 = vtanh.pop %v1315
    %v1317 = vadd.f32 %v1316, 1.0
    %v1318 = vmul.f32 %v1317, 0.5
    %v1319 = vrot.slane %v1307, 4
    %v1321 = vtanh.pop %v1319
    %v1322 = vrot.slane %v1307, 6
    %v1324 = vmul.f32 %v1322, 0.5
    %v1325 = vtanh.pop %v1324
    %v1326 = vadd.f32 %v1325, 1.0
    %v1327 = vmul.f32 %v1326, 0.5
    %v1328 = vmul.f32 %v1318, %v1002
    %v1329 = vmul.f32 %v1311, %v1321
    %v1330 = vadd.f32 %v1328, %v1329
    %v1331 = vtanh.pop %v1330
    %v1332 = vmul.f32 %v1327, %v1331
    %s1333 = scalar_lea.vmem %s2, 6
    %1334 = vst [vmem:[%s1333] sm:$0x3] %v1332
    %s1335 = scalar_lea.vmem %s0, 16
    %v1336 = vld [vmem:[%s1335] sm:$0xf]
    %v1337 = vunpack.c.l.bf16 %v1336
    %v1338 = vpack.c.bf16 %v1332, %v1332
    %v1339 = vld [vmem:[%s1] sm:$0xff]
    %v1340 = vld [vmem:[%s1 + $0x8] sm:$0xff]
    %v1341 = vld [vmem:[%s1 + $0x10] sm:$0xff]
    %v1342 = vld [vmem:[%s1 + $0x18] sm:$0xff]
    %v1343 = vld [vmem:[%s1 + $0x20] sm:$0xff]
    %v1344 = vld [vmem:[%s1 + $0x28] sm:$0xff]
    %v1345 = vld [vmem:[%s1 + $0x30] sm:$0xff]
    %v1346 = vld [vmem:[%s1 + $0x38] sm:$0xff]
    %v1347 = vld [vmem:[%s1 + $0x40] sm:$0xff]
    %v1348 = vld [vmem:[%s1 + $0x48] sm:$0xff]
    %v1349 = vld [vmem:[%s1 + $0x50] sm:$0xff]
    %v1350 = vld [vmem:[%s1 + $0x58] sm:$0xff]
    %v1351 = vld [vmem:[%s1 + $0x60] sm:$0xff]
    %v1352 = vld [vmem:[%s1 + $0x68] sm:$0xff]
    %v1353 = vld [vmem:[%s1 + $0x70] sm:$0xff]
    %v1354 = vld [vmem:[%s1 + $0x78] sm:$0xff]
    %v1355 = vld [vmem:[%s1 + $0x80] sm:$0xff]
    %v1356 = vld [vmem:[%s1 + $0x88] sm:$0xff]
    %v1357 = vld [vmem:[%s1 + $0x90] sm:$0xff]
    %v1358 = vld [vmem:[%s1 + $0x98] sm:$0xff]
    %v1359 = vld [vmem:[%s1 + $0xa0] sm:$0xff]
    %v1360 = vld [vmem:[%s1 + $0xa8] sm:$0xff]
    %v1361 = vld [vmem:[%s1 + $0xb0] sm:$0xff]
    %v1362 = vld [vmem:[%s1 + $0xb8] sm:$0xff]
    %v1363 = vld [vmem:[%s1 + $0xc0] sm:$0xff]
    %v1364 = vld [vmem:[%s1 + $0xc8] sm:$0xff]
    %v1365 = vld [vmem:[%s1 + $0xd0] sm:$0xff]
    %v1366 = vld [vmem:[%s1 + $0xd8] sm:$0xff]
    %v1367 = vld [vmem:[%s1 + $0xe0] sm:$0xff]
    %v1368 = vld [vmem:[%s1 + $0xe8] sm:$0xff]
    %v1369 = vld [vmem:[%s1 + $0xf0] sm:$0xff]
    %v1370 = vld [vmem:[%s1 + $0xf8] sm:$0xff]
    %v1403 = vunpack.c.l.b16 %v1339
    %v1404 = vunpack.c.h.b16 %v1339
    %v1405 = vunpack.c.l.b16 %v1340
    %v1406 = vunpack.c.h.b16 %v1340
    %v1407 = vunpack.c.l.b16 %v1341
    %v1408 = vunpack.c.h.b16 %v1341
    %v1409 = vunpack.c.l.b16 %v1342
    %v1410 = vunpack.c.h.b16 %v1342
    %v1411 = vunpack.c.l.b16 %v1343
    %v1412 = vunpack.c.h.b16 %v1343
    %v1413 = vunpack.c.l.b16 %v1344
    %v1414 = vunpack.c.h.b16 %v1344
    %v1415 = vunpack.c.l.b16 %v1345
    %v1416 = vunpack.c.h.b16 %v1345
    %v1417 = vunpack.c.l.b16 %v1346
    %v1418 = vunpack.c.h.b16 %v1346
    %v1419 = vunpack.c.l.b16 %v1347
    %v1420 = vunpack.c.h.b16 %v1347
    %v1421 = vunpack.c.l.b16 %v1348
    %v1422 = vunpack.c.h.b16 %v1348
    %v1423 = vunpack.c.l.b16 %v1349
    %v1424 = vunpack.c.h.b16 %v1349
    %v1425 = vunpack.c.l.b16 %v1350
    %v1426 = vunpack.c.h.b16 %v1350
    %v1427 = vunpack.c.l.b16 %v1351
    %v1428 = vunpack.c.h.b16 %v1351
    %v1429 = vunpack.c.l.b16 %v1352
    %v1430 = vunpack.c.h.b16 %v1352
    %v1431 = vunpack.c.l.b16 %v1353
    %v1432 = vunpack.c.h.b16 %v1353
    %v1433 = vunpack.c.l.b16 %v1354
    %v1434 = vunpack.c.h.b16 %v1354
    %v1435 = vunpack.c.l.b16 %v1355
    %v1436 = vunpack.c.h.b16 %v1355
    %v1437 = vunpack.c.l.b16 %v1356
    %v1438 = vunpack.c.h.b16 %v1356
    %v1439 = vunpack.c.l.b16 %v1357
    %v1440 = vunpack.c.h.b16 %v1357
    %v1441 = vunpack.c.l.b16 %v1358
    %v1442 = vunpack.c.h.b16 %v1358
    %v1443 = vunpack.c.l.b16 %v1359
    %v1444 = vunpack.c.h.b16 %v1359
    %v1445 = vunpack.c.l.b16 %v1360
    %v1446 = vunpack.c.h.b16 %v1360
    %v1447 = vunpack.c.l.b16 %v1361
    %v1448 = vunpack.c.h.b16 %v1361
    %v1449 = vunpack.c.l.b16 %v1362
    %v1450 = vunpack.c.h.b16 %v1362
    %v1451 = vunpack.c.l.b16 %v1363
    %v1452 = vunpack.c.h.b16 %v1363
    %v1453 = vunpack.c.l.b16 %v1364
    %v1454 = vunpack.c.h.b16 %v1364
    %v1455 = vunpack.c.l.b16 %v1365
    %v1456 = vunpack.c.h.b16 %v1365
    %v1457 = vunpack.c.l.b16 %v1366
    %v1458 = vunpack.c.h.b16 %v1366
    %v1459 = vunpack.c.l.b16 %v1367
    %v1460 = vunpack.c.h.b16 %v1367
    %v1461 = vunpack.c.l.b16 %v1368
    %v1462 = vunpack.c.h.b16 %v1368
    %v1463 = vunpack.c.l.b16 %v1369
    %v1464 = vunpack.c.h.b16 %v1369
    %v1465 = vunpack.c.l.b16 %v1370
    %v1466 = vunpack.c.h.b16 %v1370
    %v1467 = vpack.c.b16 %v1407, %v1403
    %v1468 = vpack.c.b16 %v1408, %v1404
    %v1469 = vpack.c.b16 %v1409, %v1405
    %v1470 = vpack.c.b16 %v1410, %v1406
    %v1471 = vpack.c.b16 %v1415, %v1411
    %v1472 = vpack.c.b16 %v1416, %v1412
    %v1473 = vpack.c.b16 %v1417, %v1413
    %v1474 = vpack.c.b16 %v1418, %v1414
    %v1475 = vpack.c.b16 %v1423, %v1419
    %v1476 = vpack.c.b16 %v1424, %v1420
    %v1477 = vpack.c.b16 %v1425, %v1421
    %v1478 = vpack.c.b16 %v1426, %v1422
    %v1479 = vpack.c.b16 %v1431, %v1427
    %v1480 = vpack.c.b16 %v1432, %v1428
    %v1481 = vpack.c.b16 %v1433, %v1429
    %v1482 = vpack.c.b16 %v1434, %v1430
    %v1483 = vpack.c.b16 %v1439, %v1435
    %v1484 = vpack.c.b16 %v1440, %v1436
    %v1485 = vpack.c.b16 %v1441, %v1437
    %v1486 = vpack.c.b16 %v1442, %v1438
    %v1487 = vpack.c.b16 %v1447, %v1443
    %v1488 = vpack.c.b16 %v1448, %v1444
    %v1489 = vpack.c.b16 %v1449, %v1445
    %v1490 = vpack.c.b16 %v1450, %v1446
    %v1491 = vpack.c.b16 %v1455, %v1451
    %v1492 = vpack.c.b16 %v1456, %v1452
    %v1493 = vpack.c.b16 %v1457, %v1453
    %v1494 = vpack.c.b16 %v1458, %v1454
    %v1495 = vpack.c.b16 %v1463, %v1459
    %v1496 = vpack.c.b16 %v1464, %v1460
    %v1497 = vpack.c.b16 %v1465, %v1461
    %v1498 = vpack.c.b16 %v1466, %v1462
    %1531 = vmatprep.subr.bf16.mxu0 %v1468
    %1532 = vmatpush1.bf16.msra.mxu0 %v1467
    %1533 = vmatprep.subr.bf16.mxu0 %v1472
    %1534 = vmatpush1.bf16.msra.mxu0 %v1471
    %1535 = vmatprep.subr.bf16.mxu0 %v1476
    %1536 = vmatpush1.bf16.msra.mxu0 %v1475
    %1537 = vmatprep.subr.bf16.mxu0 %v1480
    %1538 = vmatpush1.bf16.msra.mxu0 %v1479
    %1539 = vmatprep.subr.bf16.mxu0 %v1484
    %1540 = vmatpush1.bf16.msra.mxu0 %v1483
    %1541 = vmatprep.subr.bf16.mxu0 %v1488
    %1542 = vmatpush1.bf16.msra.mxu0 %v1487
    %1543 = vmatprep.subr.bf16.mxu0 %v1492
    %1544 = vmatpush1.bf16.msra.mxu0 %v1491
    %1545 = vmatprep.subr.bf16.mxu0 %v1496
    %1546 = vmatpush1.bf16.msra.mxu0 %v1495
    %1547 = vmatprep.subr.bf16.mxu0 0
    %1548 = vmatpush1.bf16.msra.mxu0 0
    %1549 = vmatprep.subr.bf16.mxu0 0
    %1550 = vmatpush1.bf16.msra.mxu0 0
    %1551 = vmatprep.subr.bf16.mxu0 0
    %1552 = vmatpush1.bf16.msra.mxu0 0
    %1553 = vmatprep.subr.bf16.mxu0 0
    %1554 = vmatpush1.bf16.msra.mxu0 0
    %1555 = vmatprep.subr.bf16.mxu0 0
    %1556 = vmatpush1.bf16.msra.mxu0 0
    %1557 = vmatprep.subr.bf16.mxu0 0
    %1558 = vmatpush1.bf16.msra.mxu0 0
    %1559 = vmatprep.subr.bf16.mxu0 0
    %1560 = vmatpush1.bf16.msra.mxu0 0
    %1561 = vmatprep.subr.bf16.mxu0 0
    %1562 = vmatpush1.bf16.msra.mxu0 0
    %1563 = vmatprep.mubr.bf16.mxu0 0
    %1564 = vmatmul.mubr.bf16.gmra.mrb[0].mxu0 %v1338
    %v1565 = vpop.f32.mrb[0].mxu0
    %v1566 = vadd.f32 0.0, %v1565
    %v1567 = vpop.f32.mrb[0].mxu0
    %v1568 = vadd.f32 0.0, %v1567
    %v1569 = vpop.f32.mrb[0].mxu0
    %v1570 = vpop.f32.mrb[0].mxu0
    %1571 = vdwg.mxu0
    %1572 = vmatprep.subr.bf16.mxu0 %v1470
    %1573 = vmatpush1.bf16.msra.mxu0 %v1469
    %1574 = vmatprep.subr.bf16.mxu0 %v1474
    %1575 = vmatpush1.bf16.msra.mxu0 %v1473
    %1576 = vmatprep.subr.bf16.mxu0 %v1478
    %1577 = vmatpush1.bf16.msra.mxu0 %v1477
    %1578 = vmatprep.subr.bf16.mxu0 %v1482
    %1579 = vmatpush1.bf16.msra.mxu0 %v1481
    %1580 = vmatprep.subr.bf16.mxu0 %v1486
    %1581 = vmatpush1.bf16.msra.mxu0 %v1485
    %1582 = vmatprep.subr.bf16.mxu0 %v1490
    %1583 = vmatpush1.bf16.msra.mxu0 %v1489
    %1584 = vmatprep.subr.bf16.mxu0 %v1494
    %1585 = vmatpush1.bf16.msra.mxu0 %v1493
    %1586 = vmatprep.subr.bf16.mxu0 %v1498
    %1587 = vmatpush1.bf16.msra.mxu0 %v1497
    %1588 = vmatprep.subr.bf16.mxu0 0
    %1589 = vmatpush1.bf16.msra.mxu0 0
    %1590 = vmatprep.subr.bf16.mxu0 0
    %1591 = vmatpush1.bf16.msra.mxu0 0
    %1592 = vmatprep.subr.bf16.mxu0 0
    %1593 = vmatpush1.bf16.msra.mxu0 0
    %1594 = vmatprep.subr.bf16.mxu0 0
    %1595 = vmatpush1.bf16.msra.mxu0 0
    %1596 = vmatprep.subr.bf16.mxu0 0
    %1597 = vmatpush1.bf16.msra.mxu0 0
    %1598 = vmatprep.subr.bf16.mxu0 0
    %1599 = vmatpush1.bf16.msra.mxu0 0
    %1600 = vmatprep.subr.bf16.mxu0 0
    %1601 = vmatpush1.bf16.msra.mxu0 0
    %1602 = vmatprep.subr.bf16.mxu0 0
    %1603 = vmatpush1.bf16.msra.mxu0 0
    %1604 = vmatprep.mubr.bf16.mxu0 0
    %1605 = vmatmul.mubr.bf16.gmra.mrb[0].mxu0 %v1338
    %v1606 = vpop.f32.mrb[0].mxu0
    %v1607 = vadd.f32 0.0, %v1606
    %v1608 = vpop.f32.mrb[0].mxu0
    %v1609 = vadd.f32 0.0, %v1608
    %v1610 = vpop.f32.mrb[0].mxu0
    %v1611 = vpop.f32.mrb[0].mxu0
    %1612 = vdwg.mxu0
    %v1617 = vcombine.low %v1566, %v1568
    %v1618 = vcombine.low %v1607, %v1609
    %v1620 = vunpack.c.l.s4 1983009808
    %v1621 = vunpack.c.0.s8 %v1620
    %v1622 = vlaneseq
    %v1623 = vshrl.u32 %v1622, 7
    %v1624 = vsub.s32 %v1621, %v1623
    %v1625 = vrot.slane %v1617, %v1624
    %v1627 = vunpack.c.l.s4 1983009808
    %v1628 = vunpack.c.0.s8 %v1627
    %v1629 = vlaneseq
    %v1630 = vshrl.u32 %v1629, 7
    %v1631 = vsub.s32 %v1628, %v1630
    %v1632 = vrot.slane %v1618, %v1631
    %v1633 = vcombine.low %v1625, %v1632
    %v1635 = vadd.f32 %v1337, %v1633
    %v1636 = vmul.f32 %v1635, 0.5
    %v1637 = vtanh.pop %v1636
    %v1638 = vadd.f32 %v1637, 1.0
    %v1639 = vmul.f32 %v1638, 0.5
    %v1641 = vrot.slane %v1635, 2
    %v1643 = vmul.f32 %v1641, 0.5
    %v1644 = vtanh.pop %v1643
    %v1645 = vadd.f32 %v1644, 1.0
    %v1646 = vmul.f32 %v1645, 0.5
    %v1647 = vrot.slane %v1635, 4
    %v1649 = vtanh.pop %v1647
    %v1650 = vrot.slane %v1635, 6
    %v1652 = vmul.f32 %v1650, 0.5
    %v1653 = vtanh.pop %v1652
    %v1654 = vadd.f32 %v1653, 1.0
    %v1655 = vmul.f32 %v1654, 0.5
    %v1656 = vmul.f32 %v1646, %v1330
    %v1657 = vmul.f32 %v1639, %v1649
    %v1658 = vadd.f32 %v1656, %v1657
    %v1659 = vtanh.pop %v1658
    %v1660 = vmul.f32 %v1655, %v1659
    %s1661 = scalar_lea.vmem %s2, 8
    %1662 = vst [vmem:[%s1661] sm:$0x3] %v1660
    %s1663 = scalar_lea.vmem %s0, 20
    %v1664 = vld [vmem:[%s1663] sm:$0xf]
    %v1665 = vunpack.c.l.bf16 %v1664
    %v1666 = vpack.c.bf16 %v1660, %v1660
    %v1667 = vld [vmem:[%s1] sm:$0xff]
    %v1668 = vld [vmem:[%s1 + $0x8] sm:$0xff]
    %v1669 = vld [vmem:[%s1 + $0x10] sm:$0xff]
    %v1670 = vld [vmem:[%s1 + $0x18] sm:$0xff]
    %v1671 = vld [vmem:[%s1 + $0x20] sm:$0xff]
    %v1672 = vld [vmem:[%s1 + $0x28] sm:$0xff]
    %v1673 = vld [vmem:[%s1 + $0x30] sm:$0xff]
    %v1674 = vld [vmem:[%s1 + $0x38] sm:$0xff]
    %v1675 = vld [vmem:[%s1 + $0x40] sm:$0xff]
    %v1676 = vld [vmem:[%s1 + $0x48] sm:$0xff]
    %v1677 = vld [vmem:[%s1 + $0x50] sm:$0xff]
    %v1678 = vld [vmem:[%s1 + $0x58] sm:$0xff]
    %v1679 = vld [vmem:[%s1 + $0x60] sm:$0xff]
    %v1680 = vld [vmem:[%s1 + $0x68] sm:$0xff]
    %v1681 = vld [vmem:[%s1 + $0x70] sm:$0xff]
    %v1682 = vld [vmem:[%s1 + $0x78] sm:$0xff]
    %v1683 = vld [vmem:[%s1 + $0x80] sm:$0xff]
    %v1684 = vld [vmem:[%s1 + $0x88] sm:$0xff]
    %v1685 = vld [vmem:[%s1 + $0x90] sm:$0xff]
    %v1686 = vld [vmem:[%s1 + $0x98] sm:$0xff]
    %v1687 = vld [vmem:[%s1 + $0xa0] sm:$0xff]
    %v1688 = vld [vmem:[%s1 + $0xa8] sm:$0xff]
    %v1689 = vld [vmem:[%s1 + $0xb0] sm:$0xff]
    %v1690 = vld [vmem:[%s1 + $0xb8] sm:$0xff]
    %v1691 = vld [vmem:[%s1 + $0xc0] sm:$0xff]
    %v1692 = vld [vmem:[%s1 + $0xc8] sm:$0xff]
    %v1693 = vld [vmem:[%s1 + $0xd0] sm:$0xff]
    %v1694 = vld [vmem:[%s1 + $0xd8] sm:$0xff]
    %v1695 = vld [vmem:[%s1 + $0xe0] sm:$0xff]
    %v1696 = vld [vmem:[%s1 + $0xe8] sm:$0xff]
    %v1697 = vld [vmem:[%s1 + $0xf0] sm:$0xff]
    %v1698 = vld [vmem:[%s1 + $0xf8] sm:$0xff]
    %v1731 = vunpack.c.l.b16 %v1667
    %v1732 = vunpack.c.h.b16 %v1667
    %v1733 = vunpack.c.l.b16 %v1668
    %v1734 = vunpack.c.h.b16 %v1668
    %v1735 = vunpack.c.l.b16 %v1669
    %v1736 = vunpack.c.h.b16 %v1669
    %v1737 = vunpack.c.l.b16 %v1670
    %v1738 = vunpack.c.h.b16 %v1670
    %v1739 = vunpack.c.l.b16 %v1671
    %v1740 = vunpack.c.h.b16 %v1671
    %v1741 = vunpack.c.l.b16 %v1672
    %v1742 = vunpack.c.h.b16 %v1672
    %v1743 = vunpack.c.l.b16 %v1673
    %v1744 = vunpack.c.h.b16 %v1673
    %v1745 = vunpack.c.l.b16 %v1674
    %v1746 = vunpack.c.h.b16 %v1674
    %v1747 = vunpack.c.l.b16 %v1675
    %v1748 = vunpack.c.h.b16 %v1675
    %v1749 = vunpack.c.l.b16 %v1676
    %v1750 = vunpack.c.h.b16 %v1676
    %v1751 = vunpack.c.l.b16 %v1677
    %v1752 = vunpack.c.h.b16 %v1677
    %v1753 = vunpack.c.l.b16 %v1678
    %v1754 = vunpack.c.h.b16 %v1678
    %v1755 = vunpack.c.l.b16 %v1679
    %v1756 = vunpack.c.h.b16 %v1679
    %v1757 = vunpack.c.l.b16 %v1680
    %v1758 = vunpack.c.h.b16 %v1680
    %v1759 = vunpack.c.l.b16 %v1681
    %v1760 = vunpack.c.h.b16 %v1681
    %v1761 = vunpack.c.l.b16 %v1682
    %v1762 = vunpack.c.h.b16 %v1682
    %v1763 = vunpack.c.l.b16 %v1683
    %v1764 = vunpack.c.h.b16 %v1683
    %v1765 = vunpack.c.l.b16 %v1684
    %v1766 = vunpack.c.h.b16 %v1684
    %v1767 = vunpack.c.l.b16 %v1685
    %v1768 = vunpack.c.h.b16 %v1685
    %v1769 = vunpack.c.l.b16 %v1686
    %v1770 = vunpack.c.h.b16 %v1686
    %v1771 = vunpack.c.l.b16 %v1687
    %v1772 = vunpack.c.h.b16 %v1687
    %v1773 = vunpack.c.l.b16 %v1688
    %v1774 = vunpack.c.h.b16 %v1688
    %v1775 = vunpack.c.l.b16 %v1689
    %v1776 = vunpack.c.h.b16 %v1689
    %v1777 = vunpack.c.l.b16 %v1690
    %v1778 = vunpack.c.h.b16 %v1690
    %v1779 = vunpack.c.l.b16 %v1691
    %v1780 = vunpack.c.h.b16 %v1691
    %v1781 = vunpack.c.l.b16 %v1692
    %v1782 = vunpack.c.h.b16 %v1692
    %v1783 = vunpack.c.l.b16 %v1693
    %v1784 = vunpack.c.h.b16 %v1693
    %v1785 = vunpack.c.l.b16 %v1694
    %v1786 = vunpack.c.h.b16 %v1694
    %v1787 = vunpack.c.l.b16 %v1695
    %v1788 = vunpack.c.h.b16 %v1695
    %v1789 = vunpack.c.l.b16 %v1696
    %v1790 = vunpack.c.h.b16 %v1696
    %v1791 = vunpack.c.l.b16 %v1697
    %v1792 = vunpack.c.h.b16 %v1697
    %v1793 = vunpack.c.l.b16 %v1698
    %v1794 = vunpack.c.h.b16 %v1698
    %v1795 = vpack.c.b16 %v1735, %v1731
    %v1796 = vpack.c.b16 %v1736, %v1732
    %v1797 = vpack.c.b16 %v1737, %v1733
    %v1798 = vpack.c.b16 %v1738, %v1734
    %v1799 = vpack.c.b16 %v1743, %v1739
    %v1800 = vpack.c.b16 %v1744, %v1740
    %v1801 = vpack.c.b16 %v1745, %v1741
    %v1802 = vpack.c.b16 %v1746, %v1742
    %v1803 = vpack.c.b16 %v1751, %v1747
    %v1804 = vpack.c.b16 %v1752, %v1748
    %v1805 = vpack.c.b16 %v1753, %v1749
    %v1806 = vpack.c.b16 %v1754, %v1750
    %v1807 = vpack.c.b16 %v1759, %v1755
    %v1808 = vpack.c.b16 %v1760, %v1756
    %v1809 = vpack.c.b16 %v1761, %v1757
    %v1810 = vpack.c.b16 %v1762, %v1758
    %v1811 = vpack.c.b16 %v1767, %v1763
    %v1812 = vpack.c.b16 %v1768, %v1764
    %v1813 = vpack.c.b16 %v1769, %v1765
    %v1814 = vpack.c.b16 %v1770, %v1766
    %v1815 = vpack.c.b16 %v1775, %v1771
    %v1816 = vpack.c.b16 %v1776, %v1772
    %v1817 = vpack.c.b16 %v1777, %v1773
    %v1818 = vpack.c.b16 %v1778, %v1774
    %v1819 = vpack.c.b16 %v1783, %v1779
    %v1820 = vpack.c.b16 %v1784, %v1780
    %v1821 = vpack.c.b16 %v1785, %v1781
    %v1822 = vpack.c.b16 %v1786, %v1782
    %v1823 = vpack.c.b16 %v1791, %v1787
    %v1824 = vpack.c.b16 %v1792, %v1788
    %v1825 = vpack.c.b16 %v1793, %v1789
    %v1826 = vpack.c.b16 %v1794, %v1790
    %1859 = vmatprep.subr.bf16.mxu0 %v1796
    %1860 = vmatpush1.bf16.msra.mxu0 %v1795
    %1861 = vmatprep.subr.bf16.mxu0 %v1800
    %1862 = vmatpush1.bf16.msra.mxu0 %v1799
    %1863 = vmatprep.subr.bf16.mxu0 %v1804
    %1864 = vmatpush1.bf16.msra.mxu0 %v1803
    %1865 = vmatprep.subr.bf16.mxu0 %v1808
    %1866 = vmatpush1.bf16.msra.mxu0 %v1807
    %1867 = vmatprep.subr.bf16.mxu0 %v1812
    %1868 = vmatpush1.bf16.msra.mxu0 %v1811
    %1869 = vmatprep.subr.bf16.mxu0 %v1816
    %1870 = vmatpush1.bf16.msra.mxu0 %v1815
    %1871 = vmatprep.subr.bf16.mxu0 %v1820
    %1872 = vmatpush1.bf16.msra.mxu0 %v1819
    %1873 = vmatprep.subr.bf16.mxu0 %v1824
    %1874 = vmatpush1.bf16.msra.mxu0 %v1823
    %1875 = vmatprep.subr.bf16.mxu0 0
    %1876 = vmatpush1.bf16.msra.mxu0 0
    %1877 = vmatprep.subr.bf16.mxu0 0
    %1878 = vmatpush1.bf16.msra.mxu0 0
    %1879 = vmatprep.subr.bf16.mxu0 0
    %1880 = vmatpush1.bf16.msra.mxu0 0
    %1881 = vmatprep.subr.bf16.mxu0 0
    %1882 = vmatpush1.bf16.msra.mxu0 0
    %1883 = vmatprep.subr.bf16.mxu0 0
    %1884 = vmatpush1.bf16.msra.mxu0 0
    %1885 = vmatprep.subr.bf16.mxu0 0
    %1886 = vmatpush1.bf16.msra.mxu0 0
    %1887 = vmatprep.subr.bf16.mxu0 0
    %1888 = vmatpush1.bf16.msra.mxu0 0
    %1889 = vmatprep.subr.bf16.mxu0 0
    %1890 = vmatpush1.bf16.msra.mxu0 0
    %1891 = vmatprep.mubr.bf16.mxu0 0
    %1892 = vmatmul.mubr.bf16.gmra.mrb[0].mxu0 %v1666
    %v1893 = vpop.f32.mrb[0].mxu0
    %v1894 = vadd.f32 0.0, %v1893
    %v1895 = vpop.f32.mrb[0].mxu0
    %v1896 = vadd.f32 0.0, %v1895
    %v1897 = vpop.f32.mrb[0].mxu0
    %v1898 = vpop.f32.mrb[0].mxu0
    %1899 = vdwg.mxu0
    %1900 = vmatprep.subr.bf16.mxu0 %v1798
    %1901 = vmatpush1.bf16.msra.mxu0 %v1797
    %1902 = vmatprep.subr.bf16.mxu0 %v1802
    %1903 = vmatpush1.bf16.msra.mxu0 %v1801
    %1904 = vmatprep.subr.bf16.mxu0 %v1806
    %1905 = vmatpush1.bf16.msra.mxu0 %v1805
    %1906 = vmatprep.subr.bf16.mxu0 %v1810
    %1907 = vmatpush1.bf16.msra.mxu0 %v1809
    %1908 = vmatprep.subr.bf16.mxu0 %v1814
    %1909 = vmatpush1.bf16.msra.mxu0 %v1813
    %1910 = vmatprep.subr.bf16.mxu0 %v1818
    %1911 = vmatpush1.bf16.msra.mxu0 %v1817
    %1912 = vmatprep.subr.bf16.mxu0 %v1822
    %1913 = vmatpush1.bf16.msra.mxu0 %v1821
    %1914 = vmatprep.subr.bf16.mxu0 %v1826
    %1915 = vmatpush1.bf16.msra.mxu0 %v1825
    %1916 = vmatprep.subr.bf16.mxu0 0
    %1917 = vmatpush1.bf16.msra.mxu0 0
    %1918 = vmatprep.subr.bf16.mxu0 0
    %1919 = vmatpush1.bf16.msra.mxu0 0
    %1920 = vmatprep.subr.bf16.mxu0 0
    %1921 = vmatpush1.bf16.msra.mxu0 0
    %1922 = vmatprep.subr.bf16.mxu0 0
    %1923 = vmatpush1.bf16.msra.mxu0 0
    %1924 = vmatprep.subr.bf16.mxu0 0
    %1925 = vmatpush1.bf16.msra.mxu0 0
    %1926 = vmatprep.subr.bf16.mxu0 0
    %1927 = vmatpush1.bf16.msra.mxu0 0
    %1928 = vmatprep.subr.bf16.mxu0 0
    %1929 = vmatpush1.bf16.msra.mxu0 0
    %1930 = vmatprep.subr.bf16.mxu0 0
    %1931 = vmatpush1.bf16.msra.mxu0 0
    %1932 = vmatprep.mubr.bf16.mxu0 0
    %1933 = vmatmul.mubr.bf16.gmra.mrb[0].mxu0 %v1666
    %v1934 = vpop.f32.mrb[0].mxu0
    %v1935 = vadd.f32 0.0, %v1934
    %v1936 = vpop.f32.mrb[0].mxu0
    %v1937 = vadd.f32 0.0, %v1936
    %v1938 = vpop.f32.mrb[0].mxu0
    %v1939 = vpop.f32.mrb[0].mxu0
    %1940 = vdwg.mxu0
    %v1945 = vcombine.low %v1894, %v1896
    %v1946 = vcombine.low %v1935, %v1937
    %v1948 = vunpack.c.l.s4 1983009808
    %v1949 = vunpack.c.0.s8 %v1948
    %v1950 = vlaneseq
    %v1951 = vshrl.u32 %v1950, 7
    %v1952 = vsub.s32 %v1949, %v1951
    %v1953 = vrot.slane %v1945, %v1952
    %v1955 = vunpack.c.l.s4 1983009808
    %v1956 = vunpack.c.0.s8 %v1955
    %v1957 = vlaneseq
    %v1958 = vshrl.u32 %v1957, 7
    %v1959 = vsub.s32 %v1956, %v1958
    %v1960 = vrot.slane %v1946, %v1959
    %v1961 = vcombine.low %v1953, %v1960
    %v1963 = vadd.f32 %v1665, %v1961
    %v1964 = vmul.f32 %v1963, 0.5
    %v1965 = vtanh.pop %v1964
    %v1966 = vadd.f32 %v1965, 1.0
    %v1967 = vmul.f32 %v1966, 0.5
    %v1969 = vrot.slane %v1963, 2
    %v1971 = vmul.f32 %v1969, 0.5
    %v1972 = vtanh.pop %v1971
    %v1973 = vadd.f32 %v1972, 1.0
    %v1974 = vmul.f32 %v1973, 0.5
    %v1975 = vrot.slane %v1963, 4
    %v1977 = vtanh.pop %v1975
    %v1978 = vrot.slane %v1963, 6
    %v1980 = vmul.f32 %v1978, 0.5
    %v1981 = vtanh.pop %v1980
    %v1982 = vadd.f32 %v1981, 1.0
    %v1983 = vmul.f32 %v1982, 0.5
    %v1984 = vmul.f32 %v1974, %v1658
    %v1985 = vmul.f32 %v1967, %v1977
    %v1986 = vadd.f32 %v1984, %v1985
    %v1987 = vtanh.pop %v1986
    %v1988 = vmul.f32 %v1983, %v1987
    %s1989 = scalar_lea.vmem %s2, 10
    %1990 = vst [vmem:[%s1989] sm:$0x3] %v1988
    %s1991 = scalar_lea.vmem %s0, 24
    %v1992 = vld [vmem:[%s1991] sm:$0xf]
    %v1993 = vunpack.c.l.bf16 %v1992
    %v1994 = vpack.c.bf16 %v1988, %v1988
    %v1995 = vld [vmem:[%s1] sm:$0xff]
    %v1996 = vld [vmem:[%s1 + $0x8] sm:$0xff]
    %v1997 = vld [vmem:[%s1 + $0x10] sm:$0xff]
    %v1998 = vld [vmem:[%s1 + $0x18] sm:$0xff]
    %v1999 = vld [vmem:[%s1 + $0x20] sm:$0xff]
    %v2000 = vld [vmem:[%s1 + $0x28] sm:$0xff]
    %v2001 = vld [vmem:[%s1 + $0x30] sm:$0xff]
    %v2002 = vld [vmem:[%s1 + $0x38] sm:$0xff]
    %v2003 = vld [vmem:[%s1 + $0x40] sm:$0xff]
    %v2004 = vld [vmem:[%s1 + $0x48] sm:$0xff]
    %v2005 = vld [vmem:[%s1 + $0x50] sm:$0xff]
    %v2006 = vld [vmem:[%s1 + $0x58] sm:$0xff]
    %v2007 = vld [vmem:[%s1 + $0x60] sm:$0xff]
    %v2008 = vld [vmem:[%s1 + $0x68] sm:$0xff]
    %v2009 = vld [vmem:[%s1 + $0x70] sm:$0xff]
    %v2010 = vld [vmem:[%s1 + $0x78] sm:$0xff]
    %v2011 = vld [vmem:[%s1 + $0x80] sm:$0xff]
    %v2012 = vld [vmem:[%s1 + $0x88] sm:$0xff]
    %v2013 = vld [vmem:[%s1 + $0x90] sm:$0xff]
    %v2014 = vld [vmem:[%s1 + $0x98] sm:$0xff]
    %v2015 = vld [vmem:[%s1 + $0xa0] sm:$0xff]
    %v2016 = vld [vmem:[%s1 + $0xa8] sm:$0xff]
    %v2017 = vld [vmem:[%s1 + $0xb0] sm:$0xff]
    %v2018 = vld [vmem:[%s1 + $0xb8] sm:$0xff]
    %v2019 = vld [vmem:[%s1 + $0xc0] sm:$0xff]
    %v2020 = vld [vmem:[%s1 + $0xc8] sm:$0xff]
    %v2021 = vld [vmem:[%s1 + $0xd0] sm:$0xff]
    %v2022 = vld [vmem:[%s1 + $0xd8] sm:$0xff]
    %v2023 = vld [vmem:[%s1 + $0xe0] sm:$0xff]
    %v2024 = vld [vmem:[%s1 + $0xe8] sm:$0xff]
    %v2025 = vld [vmem:[%s1 + $0xf0] sm:$0xff]
    %v2026 = vld [vmem:[%s1 + $0xf8] sm:$0xff]
    %v2059 = vunpack.c.l.b16 %v1995
    %v2060 = vunpack.c.h.b16 %v1995
    %v2061 = vunpack.c.l.b16 %v1996
    %v2062 = vunpack.c.h.b16 %v1996
    %v2063 = vunpack.c.l.b16 %v1997
    %v2064 = vunpack.c.h.b16 %v1997
    %v2065 = vunpack.c.l.b16 %v1998
    %v2066 = vunpack.c.h.b16 %v1998
    %v2067 = vunpack.c.l.b16 %v1999
    %v2068 = vunpack.c.h.b16 %v1999
    %v2069 = vunpack.c.l.b16 %v2000
    %v2070 = vunpack.c.h.b16 %v2000
    %v2071 = vunpack.c.l.b16 %v2001
    %v2072 = vunpack.c.h.b16 %v2001
    %v2073 = vunpack.c.l.b16 %v2002
    %v2074 = vunpack.c.h.b16 %v2002
    %v2075 = vunpack.c.l.b16 %v2003
    %v2076 = vunpack.c.h.b16 %v2003
    %v2077 = vunpack.c.l.b16 %v2004
    %v2078 = vunpack.c.h.b16 %v2004
    %v2079 = vunpack.c.l.b16 %v2005
    %v2080 = vunpack.c.h.b16 %v2005
    %v2081 = vunpack.c.l.b16 %v2006
    %v2082 = vunpack.c.h.b16 %v2006
    %v2083 = vunpack.c.l.b16 %v2007
    %v2084 = vunpack.c.h.b16 %v2007
    %v2085 = vunpack.c.l.b16 %v2008
    %v2086 = vunpack.c.h.b16 %v2008
    %v2087 = vunpack.c.l.b16 %v2009
    %v2088 = vunpack.c.h.b16 %v2009
    %v2089 = vunpack.c.l.b16 %v2010
    %v2090 = vunpack.c.h.b16 %v2010
    %v2091 = vunpack.c.l.b16 %v2011
    %v2092 = vunpack.c.h.b16 %v2011
    %v2093 = vunpack.c.l.b16 %v2012
    %v2094 = vunpack.c.h.b16 %v2012
    %v2095 = vunpack.c.l.b16 %v2013
    %v2096 = vunpack.c.h.b16 %v2013
    %v2097 = vunpack.c.l.b16 %v2014
    %v2098 = vunpack.c.h.b16 %v2014
    %v2099 = vunpack.c.l.b16 %v2015
    %v2100 = vunpack.c.h.b16 %v2015
    %v2101 = vunpack.c.l.b16 %v2016
    %v2102 = vunpack.c.h.b16 %v2016
    %v2103 = vunpack.c.l.b16 %v2017
    %v2104 = vunpack.c.h.b16 %v2017
    %v2105 = vunpack.c.l.b16 %v2018
    %v2106 = vunpack.c.h.b16 %v2018
    %v2107 = vunpack.c.l.b16 %v2019
    %v2108 = vunpack.c.h.b16 %v2019
    %v2109 = vunpack.c.l.b16 %v2020
    %v2110 = vunpack.c.h.b16 %v2020
    %v2111 = vunpack.c.l.b16 %v2021
    %v2112 = vunpack.c.h.b16 %v2021
    %v2113 = vunpack.c.l.b16 %v2022
    %v2114 = vunpack.c.h.b16 %v2022
    %v2115 = vunpack.c.l.b16 %v2023
    %v2116 = vunpack.c.h.b16 %v2023
    %v2117 = vunpack.c.l.b16 %v2024
    %v2118 = vunpack.c.h.b16 %v2024
    %v2119 = vunpack.c.l.b16 %v2025
    %v2120 = vunpack.c.h.b16 %v2025
    %v2121 = vunpack.c.l.b16 %v2026
    %v2122 = vunpack.c.h.b16 %v2026
    %v2123 = vpack.c.b16 %v2063, %v2059
    %v2124 = vpack.c.b16 %v2064, %v2060
    %v2125 = vpack.c.b16 %v2065, %v2061
    %v2126 = vpack.c.b16 %v2066, %v2062
    %v2127 = vpack.c.b16 %v2071, %v2067
    %v2128 = vpack.c.b16 %v2072, %v2068
    %v2129 = vpack.c.b16 %v2073, %v2069
    %v2130 = vpack.c.b16 %v2074, %v2070
    %v2131 = vpack.c.b16 %v2079, %v2075
    %v2132 = vpack.c.b16 %v2080, %v2076
    %v2133 = vpack.c.b16 %v2081, %v2077
    %v2134 = vpack.c.b16 %v2082, %v2078
    %v2135 = vpack.c.b16 %v2087, %v2083
    %v2136 = vpack.c.b16 %v2088, %v2084
    %v2137 = vpack.c.b16 %v2089, %v2085
    %v2138 = vpack.c.b16 %v2090, %v2086
    %v2139 = vpack.c.b16 %v2095, %v2091
    %v2140 = vpack.c.b16 %v2096, %v2092
    %v2141 = vpack.c.b16 %v2097, %v2093
    %v2142 = vpack.c.b16 %v2098, %v2094
    %v2143 = vpack.c.b16 %v2103, %v2099
    %v2144 = vpack.c.b16 %v2104, %v2100
    %v2145 = vpack.c.b16 %v2105, %v2101
    %v2146 = vpack.c.b16 %v2106, %v2102
    %v2147 = vpack.c.b16 %v2111, %v2107
    %v2148 = vpack.c.b16 %v2112, %v2108
    %v2149 = vpack.c.b16 %v2113, %v2109
    %v2150 = vpack.c.b16 %v2114, %v2110
    %v2151 = vpack.c.b16 %v2119, %v2115
    %v2152 = vpack.c.b16 %v2120, %v2116
    %v2153 = vpack.c.b16 %v2121, %v2117
    %v2154 = vpack.c.b16 %v2122, %v2118
    %2187 = vmatprep.subr.bf16.mxu0 %v2124
    %2188 = vmatpush1.bf16.msra.mxu0 %v2123
    %2189 = vmatprep.subr.bf16.mxu0 %v2128
    %2190 = vmatpush1.bf16.msra.mxu0 %v2127
    %2191 = vmatprep.subr.bf16.mxu0 %v2132
    %2192 = vmatpush1.bf16.msra.mxu0 %v2131
    %2193 = vmatprep.subr.bf16.mxu0 %v2136
    %2194 = vmatpush1.bf16.msra.mxu0 %v2135
    %2195 = vmatprep.subr.bf16.mxu0 %v2140
    %2196 = vmatpush1.bf16.msra.mxu0 %v2139
    %2197 = vmatprep.subr.bf16.mxu0 %v2144
    %2198 = vmatpush1.bf16.msra.mxu0 %v2143
    %2199 = vmatprep.subr.bf16.mxu0 %v2148
    %2200 = vmatpush1.bf16.msra.mxu0 %v2147
    %2201 = vmatprep.subr.bf16.mxu0 %v2152
    %2202 = vmatpush1.bf16.msra.mxu0 %v2151
    %2203 = vmatprep.subr.bf16.mxu0 0
    %2204 = vmatpush1.bf16.msra.mxu0 0
    %2205 = vmatprep.subr.bf16.mxu0 0
    %2206 = vmatpush1.bf16.msra.mxu0 0
    %2207 = vmatprep.subr.bf16.mxu0 0
    %2208 = vmatpush1.bf16.msra.mxu0 0
    %2209 = vmatprep.subr.bf16.mxu0 0
    %2210 = vmatpush1.bf16.msra.mxu0 0
    %2211 = vmatprep.subr.bf16.mxu0 0
    %2212 = vmatpush1.bf16.msra.mxu0 0
    %2213 = vmatprep.subr.bf16.mxu0 0
    %2214 = vmatpush1.bf16.msra.mxu0 0
    %2215 = vmatprep.subr.bf16.mxu0 0
    %2216 = vmatpush1.bf16.msra.mxu0 0
    %2217 = vmatprep.subr.bf16.mxu0 0
    %2218 = vmatpush1.bf16.msra.mxu0 0
    %2219 = vmatprep.mubr.bf16.mxu0 0
    %2220 = vmatmul.mubr.bf16.gmra.mrb[0].mxu0 %v1994
    %v2221 = vpop.f32.mrb[0].mxu0
    %v2222 = vadd.f32 0.0, %v2221
    %v2223 = vpop.f32.mrb[0].mxu0
    %v2224 = vadd.f32 0.0, %v2223
    %v2225 = vpop.f32.mrb[0].mxu0
    %v2226 = vpop.f32.mrb[0].mxu0
    %2227 = vdwg.mxu0
    %2228 = vmatprep.subr.bf16.mxu0 %v2126
    %2229 = vmatpush1.bf16.msra.mxu0 %v2125
    %2230 = vmatprep.subr.bf16.mxu0 %v2130
    %2231 = vmatpush1.bf16.msra.mxu0 %v2129
    %2232 = vmatprep.subr.bf16.mxu0 %v2134
    %2233 = vmatpush1.bf16.msra.mxu0 %v2133
    %2234 = vmatprep.subr.bf16.mxu0 %v2138
    %2235 = vmatpush1.bf16.msra.mxu0 %v2137
    %2236 = vmatprep.subr.bf16.mxu0 %v2142
    %2237 = vmatpush1.bf16.msra.mxu0 %v2141
    %2238 = vmatprep.subr.bf16.mxu0 %v2146
    %2239 = vmatpush1.bf16.msra.mxu0 %v2145
    %2240 = vmatprep.subr.bf16.mxu0 %v2150
    %2241 = vmatpush1.bf16.msra.mxu0 %v2149
    %2242 = vmatprep.subr.bf16.mxu0 %v2154
    %2243 = vmatpush1.bf16.msra.mxu0 %v2153
    %2244 = vmatprep.subr.bf16.mxu0 0
    %2245 = vmatpush1.bf16.msra.mxu0 0
    %2246 = vmatprep.subr.bf16.mxu0 0
    %2247 = vmatpush1.bf16.msra.mxu0 0
    %2248 = vmatprep.subr.bf16.mxu0 0
    %2249 = vmatpush1.bf16.msra.mxu0 0
    %2250 = vmatprep.subr.bf16.mxu0 0
    %2251 = vmatpush1.bf16.msra.mxu0 0
    %2252 = vmatprep.subr.bf16.mxu0 0
    %2253 = vmatpush1.bf16.msra.mxu0 0
    %2254 = vmatprep.subr.bf16.mxu0 0
    %2255 = vmatpush1.bf16.msra.mxu0 0
    %2256 = vmatprep.subr.bf16.mxu0 0
    %2257 = vmatpush1.bf16.msra.mxu0 0
    %2258 = vmatprep.subr.bf16.mxu0 0
    %2259 = vmatpush1.bf16.msra.mxu0 0
    %2260 = vmatprep.mubr.bf16.mxu0 0
    %2261 = vmatmul.mubr.bf16.gmra.mrb[0].mxu0 %v1994
    %v2262 = vpop.f32.mrb[0].mxu0
    %v2263 = vadd.f32 0.0, %v2262
    %v2264 = vpop.f32.mrb[0].mxu0
    %v2265 = vadd.f32 0.0, %v2264
    %v2266 = vpop.f32.mrb[0].mxu0
    %v2267 = vpop.f32.mrb[0].mxu0
    %2268 = vdwg.mxu0
    %v2273 = vcombine.low %v2222, %v2224
    %v2274 = vcombine.low %v2263, %v2265
    %v2276 = vunpack.c.l.s4 1983009808
    %v2277 = vunpack.c.0.s8 %v2276
    %v2278 = vlaneseq
    %v2279 = vshrl.u32 %v2278, 7
    %v2280 = vsub.s32 %v2277, %v2279
    %v2281 = vrot.slane %v2273, %v2280
    %v2283 = vunpack.c.l.s4 1983009808
    %v2284 = vunpack.c.0.s8 %v2283
    %v2285 = vlaneseq
    %v2286 = vshrl.u32 %v2285, 7
    %v2287 = vsub.s32 %v2284, %v2286
    %v2288 = vrot.slane %v2274, %v2287
    %v2289 = vcombine.low %v2281, %v2288
    %v2291 = vadd.f32 %v1993, %v2289
    %v2292 = vmul.f32 %v2291, 0.5
    %v2293 = vtanh.pop %v2292
    %v2294 = vadd.f32 %v2293, 1.0
    %v2295 = vmul.f32 %v2294, 0.5
    %v2297 = vrot.slane %v2291, 2
    %v2299 = vmul.f32 %v2297, 0.5
    %v2300 = vtanh.pop %v2299
    %v2301 = vadd.f32 %v2300, 1.0
    %v2302 = vmul.f32 %v2301, 0.5
    %v2303 = vrot.slane %v2291, 4
    %v2305 = vtanh.pop %v2303
    %v2306 = vrot.slane %v2291, 6
    %v2308 = vmul.f32 %v2306, 0.5
    %v2309 = vtanh.pop %v2308
    %v2310 = vadd.f32 %v2309, 1.0
    %v2311 = vmul.f32 %v2310, 0.5
    %v2312 = vmul.f32 %v2302, %v1986
    %v2313 = vmul.f32 %v2295, %v2305
    %v2314 = vadd.f32 %v2312, %v2313
    %v2315 = vtanh.pop %v2314
    %v2316 = vmul.f32 %v2311, %v2315
    %s2317 = scalar_lea.vmem %s2, 12
    %2318 = vst [vmem:[%s2317] sm:$0x3] %v2316
    %s2319 = scalar_lea.vmem %s0, 28
    %v2320 = vld [vmem:[%s2319] sm:$0xf]
    %v2321 = vunpack.c.l.bf16 %v2320
    %v2322 = vpack.c.bf16 %v2316, %v2316
    %v2323 = vld [vmem:[%s1] sm:$0xff]
    %v2324 = vld [vmem:[%s1 + $0x8] sm:$0xff]
    %v2325 = vld [vmem:[%s1 + $0x10] sm:$0xff]
    %v2326 = vld [vmem:[%s1 + $0x18] sm:$0xff]
    %v2327 = vld [vmem:[%s1 + $0x20] sm:$0xff]
    %v2328 = vld [vmem:[%s1 + $0x28] sm:$0xff]
    %v2329 = vld [vmem:[%s1 + $0x30] sm:$0xff]
    %v2330 = vld [vmem:[%s1 + $0x38] sm:$0xff]
    %v2331 = vld [vmem:[%s1 + $0x40] sm:$0xff]
    %v2332 = vld [vmem:[%s1 + $0x48] sm:$0xff]
    %v2333 = vld [vmem:[%s1 + $0x50] sm:$0xff]
    %v2334 = vld [vmem:[%s1 + $0x58] sm:$0xff]
    %v2335 = vld [vmem:[%s1 + $0x60] sm:$0xff]
    %v2336 = vld [vmem:[%s1 + $0x68] sm:$0xff]
    %v2337 = vld [vmem:[%s1 + $0x70] sm:$0xff]
    %v2338 = vld [vmem:[%s1 + $0x78] sm:$0xff]
    %v2339 = vld [vmem:[%s1 + $0x80] sm:$0xff]
    %v2340 = vld [vmem:[%s1 + $0x88] sm:$0xff]
    %v2341 = vld [vmem:[%s1 + $0x90] sm:$0xff]
    %v2342 = vld [vmem:[%s1 + $0x98] sm:$0xff]
    %v2343 = vld [vmem:[%s1 + $0xa0] sm:$0xff]
    %v2344 = vld [vmem:[%s1 + $0xa8] sm:$0xff]
    %v2345 = vld [vmem:[%s1 + $0xb0] sm:$0xff]
    %v2346 = vld [vmem:[%s1 + $0xb8] sm:$0xff]
    %v2347 = vld [vmem:[%s1 + $0xc0] sm:$0xff]
    %v2348 = vld [vmem:[%s1 + $0xc8] sm:$0xff]
    %v2349 = vld [vmem:[%s1 + $0xd0] sm:$0xff]
    %v2350 = vld [vmem:[%s1 + $0xd8] sm:$0xff]
    %v2351 = vld [vmem:[%s1 + $0xe0] sm:$0xff]
    %v2352 = vld [vmem:[%s1 + $0xe8] sm:$0xff]
    %v2353 = vld [vmem:[%s1 + $0xf0] sm:$0xff]
    %v2354 = vld [vmem:[%s1 + $0xf8] sm:$0xff]
    %v2387 = vunpack.c.l.b16 %v2323
    %v2388 = vunpack.c.h.b16 %v2323
    %v2389 = vunpack.c.l.b16 %v2324
    %v2390 = vunpack.c.h.b16 %v2324
    %v2391 = vunpack.c.l.b16 %v2325
    %v2392 = vunpack.c.h.b16 %v2325
    %v2393 = vunpack.c.l.b16 %v2326
    %v2394 = vunpack.c.h.b16 %v2326
    %v2395 = vunpack.c.l.b16 %v2327
    %v2396 = vunpack.c.h.b16 %v2327
    %v2397 = vunpack.c.l.b16 %v2328
    %v2398 = vunpack.c.h.b16 %v2328
    %v2399 = vunpack.c.l.b16 %v2329
    %v2400 = vunpack.c.h.b16 %v2329
    %v2401 = vunpack.c.l.b16 %v2330
    %v2402 = vunpack.c.h.b16 %v2330
    %v2403 = vunpack.c.l.b16 %v2331
    %v2404 = vunpack.c.h.b16 %v2331
    %v2405 = vunpack.c.l.b16 %v2332
    %v2406 = vunpack.c.h.b16 %v2332
    %v2407 = vunpack.c.l.b16 %v2333
    %v2408 = vunpack.c.h.b16 %v2333
    %v2409 = vunpack.c.l.b16 %v2334
    %v2410 = vunpack.c.h.b16 %v2334
    %v2411 = vunpack.c.l.b16 %v2335
    %v2412 = vunpack.c.h.b16 %v2335
    %v2413 = vunpack.c.l.b16 %v2336
    %v2414 = vunpack.c.h.b16 %v2336
    %v2415 = vunpack.c.l.b16 %v2337
    %v2416 = vunpack.c.h.b16 %v2337
    %v2417 = vunpack.c.l.b16 %v2338
    %v2418 = vunpack.c.h.b16 %v2338
    %v2419 = vunpack.c.l.b16 %v2339
    %v2420 = vunpack.c.h.b16 %v2339
    %v2421 = vunpack.c.l.b16 %v2340
    %v2422 = vunpack.c.h.b16 %v2340
    %v2423 = vunpack.c.l.b16 %v2341
    %v2424 = vunpack.c.h.b16 %v2341
    %v2425 = vunpack.c.l.b16 %v2342
    %v2426 = vunpack.c.h.b16 %v2342
    %v2427 = vunpack.c.l.b16 %v2343
    %v2428 = vunpack.c.h.b16 %v2343
    %v2429 = vunpack.c.l.b16 %v2344
    %v2430 = vunpack.c.h.b16 %v2344
    %v2431 = vunpack.c.l.b16 %v2345
    %v2432 = vunpack.c.h.b16 %v2345
    %v2433 = vunpack.c.l.b16 %v2346
    %v2434 = vunpack.c.h.b16 %v2346
    %v2435 = vunpack.c.l.b16 %v2347
    %v2436 = vunpack.c.h.b16 %v2347
    %v2437 = vunpack.c.l.b16 %v2348
    %v2438 = vunpack.c.h.b16 %v2348
    %v2439 = vunpack.c.l.b16 %v2349
    %v2440 = vunpack.c.h.b16 %v2349
    %v2441 = vunpack.c.l.b16 %v2350
    %v2442 = vunpack.c.h.b16 %v2350
    %v2443 = vunpack.c.l.b16 %v2351
    %v2444 = vunpack.c.h.b16 %v2351
    %v2445 = vunpack.c.l.b16 %v2352
    %v2446 = vunpack.c.h.b16 %v2352
    %v2447 = vunpack.c.l.b16 %v2353
    %v2448 = vunpack.c.h.b16 %v2353
    %v2449 = vunpack.c.l.b16 %v2354
    %v2450 = vunpack.c.h.b16 %v2354
    %v2451 = vpack.c.b16 %v2391, %v2387
    %v2452 = vpack.c.b16 %v2392, %v2388
    %v2453 = vpack.c.b16 %v2393, %v2389
    %v2454 = vpack.c.b16 %v2394, %v2390
    %v2455 = vpack.c.b16 %v2399, %v2395
    %v2456 = vpack.c.b16 %v2400, %v2396
    %v2457 = vpack.c.b16 %v2401, %v2397
    %v2458 = vpack.c.b16 %v2402, %v2398
    %v2459 = vpack.c.b16 %v2407, %v2403
    %v2460 = vpack.c.b16 %v2408, %v2404
    %v2461 = vpack.c.b16 %v2409, %v2405
    %v2462 = vpack.c.b16 %v2410, %v2406
    %v2463 = vpack.c.b16 %v2415, %v2411
    %v2464 = vpack.c.b16 %v2416, %v2412
    %v2465 = vpack.c.b16 %v2417, %v2413
    %v2466 = vpack.c.b16 %v2418, %v2414
    %v2467 = vpack.c.b16 %v2423, %v2419
    %v2468 = vpack.c.b16 %v2424, %v2420
    %v2469 = vpack.c.b16 %v2425, %v2421
    %v2470 = vpack.c.b16 %v2426, %v2422
    %v2471 = vpack.c.b16 %v2431, %v2427
    %v2472 = vpack.c.b16 %v2432, %v2428
    %v2473 = vpack.c.b16 %v2433, %v2429
    %v2474 = vpack.c.b16 %v2434, %v2430
    %v2475 = vpack.c.b16 %v2439, %v2435
    %v2476 = vpack.c.b16 %v2440, %v2436
    %v2477 = vpack.c.b16 %v2441, %v2437
    %v2478 = vpack.c.b16 %v2442, %v2438
    %v2479 = vpack.c.b16 %v2447, %v2443
    %v2480 = vpack.c.b16 %v2448, %v2444
    %v2481 = vpack.c.b16 %v2449, %v2445
    %v2482 = vpack.c.b16 %v2450, %v2446
    %2515 = vmatprep.subr.bf16.mxu0 %v2452
    %2516 = vmatpush1.bf16.msra.mxu0 %v2451
    %2517 = vmatprep.subr.bf16.mxu0 %v2456
    %2518 = vmatpush1.bf16.msra.mxu0 %v2455
    %2519 = vmatprep.subr.bf16.mxu0 %v2460
    %2520 = vmatpush1.bf16.msra.mxu0 %v2459
    %2521 = vmatprep.subr.bf16.mxu0 %v2464
    %2522 = vmatpush1.bf16.msra.mxu0 %v2463
    %2523 = vmatprep.subr.bf16.mxu0 %v2468
    %2524 = vmatpush1.bf16.msra.mxu0 %v2467
    %2525 = vmatprep.subr.bf16.mxu0 %v2472
    %2526 = vmatpush1.bf16.msra.mxu0 %v2471
    %2527 = vmatprep.subr.bf16.mxu0 %v2476
    %2528 = vmatpush1.bf16.msra.mxu0 %v2475
    %2529 = vmatprep.subr.bf16.mxu0 %v2480
    %2530 = vmatpush1.bf16.msra.mxu0 %v2479
    %2531 = vmatprep.subr.bf16.mxu0 0
    %2532 = vmatpush1.bf16.msra.mxu0 0
    %2533 = vmatprep.subr.bf16.mxu0 0
    %2534 = vmatpush1.bf16.msra.mxu0 0
    %2535 = vmatprep.subr.bf16.mxu0 0
    %2536 = vmatpush1.bf16.msra.mxu0 0
    %2537 = vmatprep.subr.bf16.mxu0 0
    %2538 = vmatpush1.bf16.msra.mxu0 0
    %2539 = vmatprep.subr.bf16.mxu0 0
    %2540 = vmatpush1.bf16.msra.mxu0 0
    %2541 = vmatprep.subr.bf16.mxu0 0
    %2542 = vmatpush1.bf16.msra.mxu0 0
    %2543 = vmatprep.subr.bf16.mxu0 0
    %2544 = vmatpush1.bf16.msra.mxu0 0
    %2545 = vmatprep.subr.bf16.mxu0 0
    %2546 = vmatpush1.bf16.msra.mxu0 0
    %2547 = vmatprep.mubr.bf16.mxu0 0
    %2548 = vmatmul.mubr.bf16.gmra.mrb[0].mxu0 %v2322
    %v2549 = vpop.f32.mrb[0].mxu0
    %v2550 = vadd.f32 0.0, %v2549
    %v2551 = vpop.f32.mrb[0].mxu0
    %v2552 = vadd.f32 0.0, %v2551
    %v2553 = vpop.f32.mrb[0].mxu0
    %v2554 = vpop.f32.mrb[0].mxu0
    %2555 = vdwg.mxu0
    %2556 = vmatprep.subr.bf16.mxu0 %v2454
    %2557 = vmatpush1.bf16.msra.mxu0 %v2453
    %2558 = vmatprep.subr.bf16.mxu0 %v2458
    %2559 = vmatpush1.bf16.msra.mxu0 %v2457
    %2560 = vmatprep.subr.bf16.mxu0 %v2462
    %2561 = vmatpush1.bf16.msra.mxu0 %v2461
    %2562 = vmatprep.subr.bf16.mxu0 %v2466
    %2563 = vmatpush1.bf16.msra.mxu0 %v2465
    %2564 = vmatprep.subr.bf16.mxu0 %v2470
    %2565 = vmatpush1.bf16.msra.mxu0 %v2469
    %2566 = vmatprep.subr.bf16.mxu0 %v2474
    %2567 = vmatpush1.bf16.msra.mxu0 %v2473
    %2568 = vmatprep.subr.bf16.mxu0 %v2478
    %2569 = vmatpush1.bf16.msra.mxu0 %v2477
    %2570 = vmatprep.subr.bf16.mxu0 %v2482
    %2571 = vmatpush1.bf16.msra.mxu0 %v2481
    %2572 = vmatprep.subr.bf16.mxu0 0
    %2573 = vmatpush1.bf16.msra.mxu0 0
    %2574 = vmatprep.subr.bf16.mxu0 0
    %2575 = vmatpush1.bf16.msra.mxu0 0
    %2576 = vmatprep.subr.bf16.mxu0 0
    %2577 = vmatpush1.bf16.msra.mxu0 0
    %2578 = vmatprep.subr.bf16.mxu0 0
    %2579 = vmatpush1.bf16.msra.mxu0 0
    %2580 = vmatprep.subr.bf16.mxu0 0
    %2581 = vmatpush1.bf16.msra.mxu0 0
    %2582 = vmatprep.subr.bf16.mxu0 0
    %2583 = vmatpush1.bf16.msra.mxu0 0
    %2584 = vmatprep.subr.bf16.mxu0 0
    %2585 = vmatpush1.bf16.msra.mxu0 0
    %2586 = vmatprep.subr.bf16.mxu0 0
    %2587 = vmatpush1.bf16.msra.mxu0 0
    %2588 = vmatprep.mubr.bf16.mxu0 0
    %2589 = vmatmul.mubr.bf16.gmra.mrb[0].mxu0 %v2322
    %v2590 = vpop.f32.mrb[0].mxu0
    %v2591 = vadd.f32 0.0, %v2590
    %v2592 = vpop.f32.mrb[0].mxu0
    %v2593 = vadd.f32 0.0, %v2592
    %v2594 = vpop.f32.mrb[0].mxu0
    %v2595 = vpop.f32.mrb[0].mxu0
    %2596 = vdwg.mxu0
    %v2601 = vcombine.low %v2550, %v2552
    %v2602 = vcombine.low %v2591, %v2593
    %v2604 = vunpack.c.l.s4 1983009808
    %v2605 = vunpack.c.0.s8 %v2604
    %v2606 = vlaneseq
    %v2607 = vshrl.u32 %v2606, 7
    %v2608 = vsub.s32 %v2605, %v2607
    %v2609 = vrot.slane %v2601, %v2608
    %v2611 = vunpack.c.l.s4 1983009808
    %v2612 = vunpack.c.0.s8 %v2611
    %v2613 = vlaneseq
    %v2614 = vshrl.u32 %v2613, 7
    %v2615 = vsub.s32 %v2612, %v2614
    %v2616 = vrot.slane %v2602, %v2615
    %v2617 = vcombine.low %v2609, %v2616
    %v2619 = vadd.f32 %v2321, %v2617
    %v2620 = vmul.f32 %v2619, 0.5
    %v2621 = vtanh.pop %v2620
    %v2622 = vadd.f32 %v2621, 1.0
    %v2623 = vmul.f32 %v2622, 0.5
    %v2625 = vrot.slane %v2619, 2
    %v2627 = vmul.f32 %v2625, 0.5
    %v2628 = vtanh.pop %v2627
    %v2629 = vadd.f32 %v2628, 1.0
    %v2630 = vmul.f32 %v2629, 0.5
    %v2631 = vrot.slane %v2619, 4
    %v2633 = vtanh.pop %v2631
    %v2634 = vrot.slane %v2619, 6
    %v2636 = vmul.f32 %v2634, 0.5
    %v2637 = vtanh.pop %v2636
    %v2638 = vadd.f32 %v2637, 1.0
    %v2639 = vmul.f32 %v2638, 0.5
    %v2640 = vmul.f32 %v2630, %v2314
    %v2641 = vmul.f32 %v2623, %v2633
    %v2642 = vadd.f32 %v2640, %v2641
    %v2643 = vtanh.pop %v2642
    %v2644 = vmul.f32 %v2639, %v2643
    %s2645 = scalar_lea.vmem %s2, 14
    %2646 = vst [vmem:[%s2645] sm:$0x3] %v2644
    %2647 = vst [vmem:[#allocation2] sm:$0x3] %v2644
    %2648 = vst [vmem:[#allocation4] sm:$0x3] %v2642
    // Predicated region
    $region14: #{lstm_forward.1} parent=1 // pred_check
      _
    $region15: #{lstm_forward.1} parent=1 // pred_check_branch
      %2650 = sbr.rel (0) target = $region17
    $region16: #{lstm_forward.1} parent=1 // pred_region
      _
    $region17: #{lstm_forward.1} parent=1 // pred_fallthru
      _
    // Predicated region
    $region18: #{lstm_forward.1} parent=1 // pred_check
      _
    $region19: #{lstm_forward.1} parent=1 // pred_check_branch
      %2652 = sbr.rel (0) target = $region21
    $region20: #{lstm_forward.1} parent=1 // pred_region
      %s2654 = ssub.s32 32, 32
      %2655 = vsyncadd [#allocation3], %s2654
      %s2657 = sshll.u32 [#allocation2], 4
      %s2658 = int_to_ptr.vmem [resolvable:$true] %s2657
      %2660 = dma.vmem_to_hbm [thread:$0]  %s2658, 32, %s3, [#allocation3]
    $region21: #{lstm_forward.1} parent=1 // pred_fallthru
      _
    // Predicated region
    $region22: #{lstm_forward.1} parent=1 // pred_check
      _
    $region23: #{lstm_forward.1} parent=1 // pred_check_branch
      %2662 = sbr.rel (0) target = $region25
    $region24: #{lstm_forward.1} parent=1 // pred_region
      %s2664 = ssub.s32 32, 32
      %2665 = vsyncadd [#allocation5], %s2664
      %s2667 = sshll.u32 [#allocation4], 4
      %s2668 = int_to_ptr.vmem [resolvable:$true] %s2667
      %2670 = dma.vmem_to_hbm [thread:$0]  %s2668, 32, %s4, [#allocation5]
    $region25: #{lstm_forward.1} parent=1 // pred_fallthru
      _
    // Predicated region
    $region26: #{lstm_forward.1} parent=1 // pred_check
      _
    $region27: #{lstm_forward.1} parent=1 // pred_check_branch
      %2672 = sbr.rel (0) target = $region29
    $region28: #{lstm_forward.1} parent=1 // pred_region
      _
    $region29: #{lstm_forward.1} parent=1 // pred_fallthru
      _
    // Predicated region
    $region30: #{lstm_forward.1} parent=1 // pred_check
      _
    $region31: #{lstm_forward.1} parent=1 // pred_check_branch
      %2674 = sbr.rel (0) target = $region33
    $region32: #{lstm_forward.1} parent=1 // pred_region
      %2675 = dma.done [#allocation3], 32
    $region33: #{lstm_forward.1} parent=1 // pred_fallthru
      _
    // Predicated region
    $region34: #{lstm_forward.1} parent=1 // pred_check
      _
    $region35: #{lstm_forward.1} parent=1 // pred_check_branch
      %2677 = sbr.rel (0) target = $region37
    $region36: #{lstm_forward.1} parent=1 // pred_region
      %2678 = dma.done [#allocation5], 32
    $region37: #{lstm_forward.1} parent=1 // pred_fallthru
      _
    %2679 = vsyncpa [#allocation3], 1
    %2680 = vsyncpa [#allocation5], 1

</llo_original>
